<compile_context>
chip_gen: v7x
topology: tpu7x:2x2x1
jax: 0.10.0
libtpu: 0.0.40
codegen_flags: <defaults>
</compile_context>

<pallas_src>
import jax
import jax.numpy as jnp
from jax.experimental import pallas as pl
from jax.experimental.pallas import tpu as pltpu


LANES = 1024                 # lane-dense trailing dim (multiple of 128, full vregs)
TILE_R_MAX = 1024            # 4 MiB f32 blocks (16 MiB double-buffered in+out)
TILE_R_MIN = 256             # 1 MiB f32 blocks at the small end of the Pallas range
MIN_GRID_STEPS = 4           # >= 2 blocks per TensorCore on v7x megacore
PALLAS_MIN_ELEMS = 1 << 20   # ~4 MiB f32: below this, fused-XLA FMA is strictly faster


def _round_up(a, b):
    return -(-a // b) * b


def _fma_kernel(w_ref, b_ref, x_ref, o_ref):
    # w_ref: SMEM (1, 1) f32, b_ref: SMEM (1,) f32
    # x_ref: VMEM (tile_r, LANES) native dtype, o_ref: VMEM (tile_r, LANES) f32
    w = w_ref[0, 0]
    b = b_ref[0]
    # x.float() + single fused multiply-add on the whole lane-dense tile (VPU).
    o_ref[...] = x_ref[...].astype(jnp.float32) * w + b


def _pallas_fma(x_flat, weight, bias):
    """y = float(x) * w + b on a flat vector via a lane-dense pipelined kernel."""
    n = x_flat.shape[0]
    rows = -(-n // LANES)                    # ceil-div
    n_padded = rows * LANES
    if n_padded != n:
        # At most LANES-1 trailing pad elements; row-granularity padding is
        # handled by Pallas's masked boundary block, never materialized in HBM.
        x_flat = jnp.pad(x_flat, (0, n_padded - n))
    slab = x_flat.reshape(rows, LANES)

    # Block row count: aim for >= MIN_GRID_STEPS grid steps, cap at TILE_R_MAX
    # rows, floor at TILE_R_MIN rows; multiple of 32 (safe for any input dtype).
    tile_r = min(TILE_R_MAX, max(TILE_R_MIN, -(-rows // MIN_GRID_STEPS)))
    tile_r = _round_up(tile_r, 32)
    grid = (-(-rows // tile_r),)             # boundary block masked by Pallas

    out = pl.pallas_call(
        _fma_kernel,
        out_shape=jax.ShapeDtypeStruct((rows, LANES), jnp.float32),
        grid=grid,
        in_specs=[
            pl.BlockSpec(memory_space=pltpu.SMEM),            # weight (1, 1)
            pl.BlockSpec(memory_space=pltpu.SMEM),            # bias   (1,)
            pl.BlockSpec((tile_r, LANES), lambda i: (i, 0)),  # x slab (auto double-buffered)
        ],
        out_specs=pl.BlockSpec((tile_r, LANES), lambda i: (i, 0)),
        compiler_params=pltpu.CompilerParams(
            dimension_semantics=("parallel",),    # shard rows across v7x's 2 TCs
            vmem_limit_bytes=40 * 1024 * 1024,    # v5e scoped default is only 16 MiB
        ),
    )(weight, bias, slab)

    y_flat = out.reshape(-1)
    if n_padded != n:
        y_flat = y_flat[:n]
    return y_flat


def fake_model_forward(x, weight, bias):
    """y = x.float() @ weight.T + bias for in_features = out_features = 1.

    Equivalent to y = float(x) * weight[0, 0] + bias[0], preserving x's shape.
    """
    n = x.size
    if n < PALLAS_MIN_ELEMS:
        # Small/medium batch: skip the custom-call boundary, let XLA fuse the FMA.
        return x.astype(jnp.float32) * weight[0, 0] + bias[0]
    y_flat = _pallas_fma(x.reshape(-1), weight, bias)
    return y_flat.reshape(x.shape)


if __name__ == "__main__":
    # Deterministic parameter init, matching nn.init.constant_ in the module.
    weight = jnp.full((1, 1), 2.0, dtype=jnp.float32)
    bias = jnp.full((1,), 1.0, dtype=jnp.float32)

    key = jax.random.PRNGKey(0)
    k_small, k_large = jax.random.split(key)

    # Small input (batch=8, in_features=1): fused-XLA fast path.
    x_small = jax.random.normal(k_small, (8, 1), dtype=jnp.float32)
    y_small = jax.block_until_ready(fake_model_forward(x_small, weight, bias))
    ref_small = x_small @ weight.T + bias
    assert y_small.shape == (8, 1) and y_small.dtype == jnp.float32
    assert jnp.allclose(y_small, ref_small, atol=1e-6)

    # Larger, deliberately misaligned input: exercises the Pallas path, the
    # sub-LANES pad, the masked boundary block along rows, and the in-kernel cast.
    n_large = (1 << 20) + 3
    x_large = jax.random.normal(k_large, (n_large, 1), dtype=jnp.float32)
    y_large = jax.block_until_ready(fake_model_forward(x_large, weight, bias))
    ref_large = x_large * 2.0 + 1.0
    assert y_large.shape == (n_large, 1) and y_large.dtype == jnp.float32
    assert jnp.allclose(y_large, ref_large, atol=1e-6)

    print("KERNEL_OK")
</pallas_src>

<mosaic_0001>
module attributes {stable_mosaic.version = 11 : i64} {
  func.func @_fma_kernel(%arg0: i32, %arg1: memref<1x1xf32, #tpu.memory_space<smem>>, %arg2: memref<1xf32, #tpu.memory_space<smem>>, %arg3: memref<288x1024xf32, #tpu.memory_space<vmem>>, %arg4: memref<288x1024xf32, #tpu.memory_space<vmem>>) attributes {dimension_semantics = [#tpu.dimension_semantics<parallel>], iteration_bounds = array<i64: 4>, scalar_prefetch = 0 : i64, scratch_operands = 0 : i64, tpu.core_type = #tpu.core_type<tc>, window_params = [{transform_indices = @transform_0, window_bounds = array<i64: 1, 1>}, {transform_indices = @transform_1, window_bounds = array<i64: 1>}, {transform_indices = @transform_2, window_bounds = array<i64: 288, 1024>}, {transform_indices = @transform_3, window_bounds = array<i64: 288, 1024>}]} {
    %c0 = arith.constant 0 : index
    %c0_0 = arith.constant 0 : index
    %0 = memref.load %arg1[%c0, %c0_0] : memref<1x1xf32, #tpu.memory_space<smem>>
    %c0_1 = arith.constant 0 : index
    %1 = memref.load %arg2[%c0_1] : memref<1xf32, #tpu.memory_space<smem>>
    %c0_2 = arith.constant 0 : index
    %c0_3 = arith.constant 0 : index
    %2 = vector.load %arg3[%c0_2, %c0_3] : memref<288x1024xf32, #tpu.memory_space<vmem>>, vector<288x1024xf32>
    %3 = vector.broadcast %0 : f32 to vector<288x1024xf32>
    %4 = arith.mulf %2, %3 : vector<288x1024xf32>
    %5 = vector.broadcast %1 : f32 to vector<288x1024xf32>
    %6 = arith.addf %4, %5 : vector<288x1024xf32>
    %c0_4 = arith.constant 0 : index
    %c0_5 = arith.constant 0 : index
    %7 = vector.load %arg4[%c0_4, %c0_5] : memref<288x1024xf32, #tpu.memory_space<vmem>>, vector<288x1024xf32>
    tpu.vector_store %arg4[%c0_4, %c0_5], %6 {strides = array<i32>} : memref<288x1024xf32, #tpu.memory_space<vmem>>, vector<288x1024xf32>,
    return
  }
  func.func @transform_0(%arg0: i32) -> (i32, i32) {
    %c0_i32 = arith.constant 0 : i32
    %c0_i32_0 = arith.constant 0 : i32
    %c0_i32_1 = arith.constant 0 : i32
    return %c0_i32, %c0_i32_0 : i32, i32
  }
  func.func @transform_1(%arg0: i32) -> i32 {
    %c0_i32 = arith.constant 0 : i32
    %c0_i32_0 = arith.constant 0 : i32
    return %c0_i32 : i32
  }
  func.func @transform_2(%arg0: i32) -> (i32, i32) {
    %c0_i32 = arith.constant 0 : i32
    %c0_i32_0 = arith.constant 0 : i32
    return %arg0, %c0_i32 : i32, i32
  }
  func.func @transform_3(%arg0: i32) -> (i32, i32) {
    %c0_i32 = arith.constant 0 : i32
    %c0_i32_0 = arith.constant 0 : i32
    return %arg0, %c0_i32 : i32, i32
  }
}

</mosaic_0001>

<llo_original>
// kernel: tpu_custom_call.1
$region0: #{tpu_custom_call.1}
  #allocation0 [shape = 'u32[]', space=smem, size = 0x4, offset = 0x4, fixed_abs, tag = 'smem constant byte address 0x4 - core index']
  #allocation1 [shape = 'u32[144,128]{1,0:T(1,128)}', space=vmem, size = 0x12000, scoped, tag = 'internal scratch']
  #allocation2 [shape = 'f32[1,1]{1,0:T(1,128)S(6)}', space=smem, size = 0x200, scoped, tag = 'scoped memory for tpu_custom_call.1']
  #allocation3 [shape = 'f32[1]{0:T(128)S(6)}', space=smem, size = 0x200, scoped, tag = 'scoped memory for tpu_custom_call.1']
  %s0 = inlined_call_operand.<no memory space> [shape: f32[1,1], index: 0, kind: input, shape index: {}]
  %s1 = inlined_call_operand.<no memory space> [shape: f32[1], index: 1, kind: input, shape index: {}]
  %s2 = inlined_call_operand.hbm [shape: f32[1025,1024], index: 2, kind: input, shape index: {}]
  %s3 = inlined_call_operand.hbm [shape: f32[1025,1024], index: 3, kind: output, shape index: {}]
  %s4 = sld [smem:[#allocation0]]
  $region49: #{tpu_custom_call.1} parent=0
    _
  %s6 = ssub.s32 1, %s4
  %s7 = scalar_select 0, %s6, %s4
  %8 = sst [smem:[#allocation2]] %s0
  %9 = sst [smem:[#allocation3]] %s1
  $region1: #{tpu_custom_call.1} parent=0
    #allocation4 [shape = 'u8[2359296]{0}', space=vmem, size = 0x240000, scoped, tag = 'input window, operand 2']
    #allocation5 [shape = 's32[2]{0}', space=sflag, size = 0x8, scoped, tag = 'scoped memory for tpu_custom_call.1']
    #allocation6 [shape = 's32[2]{0}', space=sflag, size = 0x8, scoped, tag = 'scoped memory for tpu_custom_call.1']
    #allocation7 [shape = 'u8[2359296]{0}', space=vmem, size = 0x240000, scoped, tag = 'output window, operand 0']
    %10 = vsyncpa [#allocation5], 0
    %s11 = scalar_lea.sflag [#allocation5], 1
    %12 = vsyncpa %s11, 0
    %13 = vsyncpa [#allocation6], 0
    %s14 = scalar_lea.sflag [#allocation6], 1
    %15 = vsyncpa %s14, 0
    loop: start=0, step=1, limit=6
    $region2: #{tpu_custom_call.1} parent=1 // loop_pre_header
      _
    $region3: #{tpu_custom_call.1} parent=1 // loop_header
      %s17 = sphi 0, %s21
      %p18 = scmp.ge.s32.totalorder %s17, 6
      %s25 = sphi 0, %s25
      %s27 = sphi 0, %s25
      %s28 = sphi 0, %s27
      %s42 = sphi 0, %s28
      %s46 = sphi 0, %s46
      %s48 = sphi 0, %s46
      %s49 = sphi 0, %s48
      %s63 = sphi 0, %s49
      %s69 = sphi 0, %s71
      %s72 = sphi 0, %s69
      %s73 = sphi 0, %s72
      %s89 = sphi 0, %s73
      %s95 = sphi 0, %s97
      %s98 = sphi 0, %s95
      %s99 = sphi 0, %s98
      %s115 = sphi 0, %s99
    $region4: #{tpu_custom_call.1} parent=1 // loop_header_branch
      %20 = sbr.rel (%p18) target = $region8
    $region5: #{tpu_custom_call.1} parent=1 // loop_body
      %s22 = ssub.s32 %s17, 1
      %s23 = ssub.s32 %s17, 2
      %s24 = sadd.s32 %s17, 1
      %s26 = sadd.s32 %s25, 1
      %p29 = scmp.eq.s32.totalorder %s17, 3
      %p30 = scmp.ne.s32.totalorder %s25, %s27
      %p31 = scmp.eq.s32.totalorder %s17, 0
      %p32 = por %p30, %p31
      %p33 = scmp.ne.s32.totalorder %s25, %s27
      %p34 = scmp.eq.s32.totalorder %s22, 3
      %p35 = por %p33, %p34
      %p36 = scmp.ne.s32.totalorder %s27, %s28
      %p37 = scmp.eq.s32.totalorder %s22, 0
      %p38 = por %p36, %p37
      %p39 = scmp.ne.s32.totalorder %s27, %s28
      %p40 = scmp.eq.s32.totalorder %s23, 3
      %p41 = por %p39, %p40
      %p43 = scmp.ne.s32.totalorder %s28, %s42
      %p44 = scmp.eq.s32.totalorder %s23, 0
      %p45 = por %p43, %p44
      %s47 = sadd.s32 %s46, 1
      %p50 = scmp.eq.s32.totalorder %s17, 3
      %p51 = scmp.ne.s32.totalorder %s46, %s48
      %p52 = scmp.eq.s32.totalorder %s17, 0
      %p53 = por %p51, %p52
      %p54 = scmp.ne.s32.totalorder %s46, %s48
      %p55 = scmp.eq.s32.totalorder %s22, 3
      %p56 = por %p54, %p55
      %p57 = scmp.ne.s32.totalorder %s48, %s49
      %p58 = scmp.eq.s32.totalorder %s22, 0
      %p59 = por %p57, %p58
      %p60 = scmp.ne.s32.totalorder %s48, %s49
      %p61 = scmp.eq.s32.totalorder %s23, 3
      %p62 = por %p60, %p61
      %p64 = scmp.ne.s32.totalorder %s49, %s63
      %p65 = scmp.eq.s32.totalorder %s23, 0
      %p66 = por %p64, %p65
      %s67 = ssub.s32 %s17, %s24
      %p68 = scmp.eq.s32.totalorder %s67, 0
      %s70 = sadd.s32 %s69, 1
      %s71 = scalar_select %p68, %s69, %s70
      %p74 = pneg %p68
      %p75 = scmp.eq.s32.totalorder %s17, 3
      %p76 = por %p74, %p75
      %p77 = scmp.ne.s32.totalorder %s69, %s72
      %p78 = scmp.eq.s32.totalorder %s17, 0
      %p79 = por %p77, %p78
      %p80 = scmp.ne.s32.totalorder %s69, %s72
      %p81 = scmp.eq.s32.totalorder %s22, 3
      %p82 = por %p80, %p81
      %p83 = scmp.ne.s32.totalorder %s72, %s73
      %p84 = scmp.eq.s32.totalorder %s22, 0
      %p85 = por %p83, %p84
      %p86 = scmp.ne.s32.totalorder %s72, %s73
      %p87 = scmp.eq.s32.totalorder %s23, 3
      %p88 = por %p86, %p87
      %p90 = scmp.ne.s32.totalorder %s73, %s89
      %p91 = scmp.eq.s32.totalorder %s23, 0
      %p92 = por %p90, %p91
      %s93 = ssub.s32 %s17, %s24
      %p94 = scmp.eq.s32.totalorder %s93, 0
      %s96 = sadd.s32 %s95, 1
      %s97 = scalar_select %p94, %s95, %s96
      %p100 = pneg %p94
      %p101 = scmp.eq.s32.totalorder %s17, 3
      %p102 = por %p100, %p101
      %p103 = scmp.ne.s32.totalorder %s95, %s98
      %p104 = scmp.eq.s32.totalorder %s17, 0
      %p105 = por %p103, %p104
      %p106 = scmp.ne.s32.totalorder %s95, %s98
      %p107 = scmp.eq.s32.totalorder %s22, 3
      %p108 = por %p106, %p107
      %p109 = scmp.ne.s32.totalorder %s98, %s99
      %p110 = scmp.eq.s32.totalorder %s22, 0
      %p111 = por %p109, %p110
      %p112 = scmp.ne.s32.totalorder %s98, %s99
      %p113 = scmp.eq.s32.totalorder %s23, 3
      %p114 = por %p112, %p113
      %p116 = scmp.ne.s32.totalorder %s99, %s115
      %p117 = scmp.eq.s32.totalorder %s23, 0
      %p118 = por %p116, %p117
      %p119 = scmp.le.s32.totalorder 1, %s17
      %p120 = scmp.lt.s32.totalorder %s17, 5
      %p121 = pnand %p119, %p120
      %p122 = pneg %p121
      // Predicated region
      $region9: #{tpu_custom_call.1} parent=5 // pred_check
        _
      $region10: #{tpu_custom_call.1} parent=5 // pred_check_branch
        %124 = sbr.rel (%p121) target = $region12
      $region11: #{tpu_custom_call.1} parent=5 // pred_region
        %s125 = ssub.s32 %s17, 1
        // Predicated region
        $region13: #{tpu_custom_call.1} parent=11 // pred_check
          %p126 = pneg %p38
        $region14: #{tpu_custom_call.1} parent=11 // pred_check_branch
          %128 = sbr.rel (%p126) target = $region16
        $region15: #{tpu_custom_call.1} parent=11 // pred_region
          _
        $region16: #{tpu_custom_call.1} parent=11 // pred_fallthru
          _
        // Predicated region
        $region17: #{tpu_custom_call.1} parent=11 // pred_check
          %p129 = pneg %p59
        $region18: #{tpu_custom_call.1} parent=11 // pred_check_branch
          %131 = sbr.rel (%p129) target = $region20
        $region19: #{tpu_custom_call.1} parent=11 // pred_region
          _
        $region20: #{tpu_custom_call.1} parent=11 // pred_fallthru
          _
      $region12: #{tpu_custom_call.1} parent=5 // pred_fallthru
        _
      %p132 = scmp.lt.s32.totalorder %s17, 4
      // Predicated region
      $region21: #{tpu_custom_call.1} parent=5 // pred_check
        %p133 = pneg %p132
      $region22: #{tpu_custom_call.1} parent=5 // pred_check_branch
        %135 = sbr.rel (%p133) target = $region24
      $region23: #{tpu_custom_call.1} parent=5 // pred_region
        // Predicated region
        $region25: #{tpu_custom_call.1} parent=23 // pred_check
          %p136 = pneg %p79
        $region26: #{tpu_custom_call.1} parent=23 // pred_check_branch
          %138 = sbr.rel (%p136) target = $region28
        $region27: #{tpu_custom_call.1} parent=23 // pred_region
          %s139 = sand.u32 %s69, 1
          %s140 = scalar_lea.sflag [#allocation5], %s139
          %s141 = sand.u32 %s69, 1
          %s142 = smul.addr %s141, 2304
          %s143 = scalar_lea.vmem [#allocation4], %s142
          %s144 = smul.u32 36, %s17
          %s145 = ssub.s32 129, %s144
          %p146 = scmp.lt.s32.totalorder %s145, 36
          %s147 = scalar_select %p146, %s145, 36
          %s148 = smul.u32 128, %s147
          %s149 = smul.u32 %s148, 8
          %s151 = ssub.s32 36864, %s149
          %152 = vsyncadd %s140, %s151
          %p153 = scmp.ne.s32.totalorder 0, %s149
          %s154 = smul.addr %s144, 8
          %s155 = smul.addr %s154, 128
          %s156 = scalar_lea.hbm %s2, %s155
          %s157 = smul.u32 64, %s147
          %s158 = sshll.u32 %s143, 4
          %s159 = int_to_ptr.vmem [resolvable:$true] %s158
          %s160 = sshll.u32 %s157, 4
          %164 = dma.hbm_to_vmem [thread:$0]  (%p153), %s156, %s160, %s159, %s140, 1024, 1024, 64
        $region28: #{tpu_custom_call.1} parent=23 // pred_fallthru
          _
      $region24: #{tpu_custom_call.1} parent=5 // pred_fallthru
        _
      %p165 = scmp.le.s32.totalorder 1, %s17
      %p166 = scmp.lt.s32.totalorder %s17, 5
      %p167 = pnand %p165, %p166
      %p168 = pneg %p167
      // Predicated region
      $region29: #{tpu_custom_call.1} parent=5 // pred_check
        _
      $region30: #{tpu_custom_call.1} parent=5 // pred_check_branch
        %170 = sbr.rel (%p167) target = $region32
      $region31: #{tpu_custom_call.1} parent=5 // pred_region
        %s171 = ssub.s32 %s17, 1
        %s172 = sand.u32 %s72, 1
        %s173 = scalar_lea.sflag [#allocation5], %s172
        %s174 = sand.u32 %s72, 1
        %s175 = smul.addr %s174, 2304
        %s176 = scalar_lea.vmem [#allocation4], %s175
        // Predicated region
        $region33: #{tpu_custom_call.1} parent=31 // pred_check
          %p177 = pneg %p85
        $region34: #{tpu_custom_call.1} parent=31 // pred_check_branch
          %179 = sbr.rel (%p177) target = $region36
        $region35: #{tpu_custom_call.1} parent=31 // pred_region
          %180 = dma.done %s173, 36864
        $region36: #{tpu_custom_call.1} parent=31 // pred_fallthru
          _
        %p181 = pneg %p38
        %p182 = pneg %p35
        %p183 = pneg %p59
        %p184 = pneg %p56
        %s185 = sand.u32 %s72, 1
        %s186 = scalar_lea.sflag [#allocation5], %s185
        %s187 = sand.u32 %s72, 1
        %s188 = smul.addr %s187, 2304
        %s189 = scalar_lea.vmem [#allocation4], %s188
        %p190 = pneg %p85
        %p191 = pneg %p82
        %p192 = pneg %p111
        %p193 = pneg %p108
        %s194 = sand.u32 %s98, 1
        %s195 = scalar_lea.sflag [#allocation6], %s194
        %s196 = sand.u32 %s98, 1
        %s197 = smul.addr %s196, 2304
        %s198 = scalar_lea.vmem [#allocation7], %s197
        %s199 = smul.u32 36, %s22
        %s200 = ssub.s32 129, %s199
        %p201 = scmp.lt.s32.totalorder %s200, 36
        %s202 = scalar_select %p201, %s200, 36
        %s203 = smul.u32 128, %s202
        %s204 = smul.u32 %s203, 8
        %s205 = smul.u32 36, %s22
        %s206 = ssub.s32 129, %s205
        %p207 = scmp.lt.s32.totalorder %s206, 36
        %s208 = scalar_select %p207, %s206, 36
        %s209 = smul.u32 128, %s208
        %s210 = smul.u32 %s209, 8
        %s211 = sld [smem:[#allocation2]]
        %s212 = sld [smem:[#allocation3]]
        %v213 = vld [vmem:[%s176] sm:$0xff]
        %v214 = vld [vmem:[%s176 + $0x8] sm:$0xff]
        %v215 = vld [vmem:[%s176 + $0x10] sm:$0xff]
        %v216 = vld [vmem:[%s176 + $0x18] sm:$0xff]
        %v217 = vld [vmem:[%s176 + $0x20] sm:$0xff]
        %v218 = vld [vmem:[%s176 + $0x28] sm:$0xff]
        %v219 = vld [vmem:[%s176 + $0x30] sm:$0xff]
        %v220 = vld [vmem:[%s176 + $0x38] sm:$0xff]
        %v221 = vld [vmem:[%s176 + $0x40] sm:$0xff]
        %v222 = vld [vmem:[%s176 + $0x48] sm:$0xff]
        %v223 = vld [vmem:[%s176 + $0x50] sm:$0xff]
        %v224 = vld [vmem:[%s176 + $0x58] sm:$0xff]
        %v225 = vld [vmem:[%s176 + $0x60] sm:$0xff]
        %v226 = vld [vmem:[%s176 + $0x68] sm:$0xff]
        %v227 = vld [vmem:[%s176 + $0x70] sm:$0xff]
        %v228 = vld [vmem:[%s176 + $0x78] sm:$0xff]
        %v229 = vld [vmem:[%s176 + $0x80] sm:$0xff]
        %v230 = vld [vmem:[%s176 + $0x88] sm:$0xff]
        %v231 = vld [vmem:[%s176 + $0x90] sm:$0xff]
        %v232 = vld [vmem:[%s176 + $0x98] sm:$0xff]
        %v233 = vld [vmem:[%s176 + $0xa0] sm:$0xff]
        %v234 = vld [vmem:[%s176 + $0xa8] sm:$0xff]
        %v235 = vld [vmem:[%s176 + $0xb0] sm:$0xff]
        %v236 = vld [vmem:[%s176 + $0xb8] sm:$0xff]
        %v237 = vld [vmem:[%s176 + $0xc0] sm:$0xff]
        %v238 = vld [vmem:[%s176 + $0xc8] sm:$0xff]
        %v239 = vld [vmem:[%s176 + $0xd0] sm:$0xff]
        %v240 = vld [vmem:[%s176 + $0xd8] sm:$0xff]
        %v241 = vld [vmem:[%s176 + $0xe0] sm:$0xff]
        %v242 = vld [vmem:[%s176 + $0xe8] sm:$0xff]
        %v243 = vld [vmem:[%s176 + $0xf0] sm:$0xff]
        %v244 = vld [vmem:[%s176 + $0xf8] sm:$0xff]
        %v245 = vld [vmem:[%s176 + $0x100] sm:$0xff]
        %v246 = vld [vmem:[%s176 + $0x108] sm:$0xff]
        %v247 = vld [vmem:[%s176 + $0x110] sm:$0xff]
        %v248 = vld [vmem:[%s176 + $0x118] sm:$0xff]
        %v249 = vld [vmem:[%s176 + $0x120] sm:$0xff]
        %v250 = vld [vmem:[%s176 + $0x128] sm:$0xff]
        %v251 = vld [vmem:[%s176 + $0x130] sm:$0xff]
        %v252 = vld [vmem:[%s176 + $0x138] sm:$0xff]
        %v253 = vld [vmem:[%s176 + $0x140] sm:$0xff]
        %v254 = vld [vmem:[%s176 + $0x148] sm:$0xff]
        %v255 = vld [vmem:[%s176 + $0x150] sm:$0xff]
        %v256 = vld [vmem:[%s176 + $0x158] sm:$0xff]
        %v257 = vld [vmem:[%s176 + $0x160] sm:$0xff]
        %v258 = vld [vmem:[%s176 + $0x168] sm:$0xff]
        %v259 = vld [vmem:[%s176 + $0x170] sm:$0xff]
        %v260 = vld [vmem:[%s176 + $0x178] sm:$0xff]
        %v261 = vld [vmem:[%s176 + $0x180] sm:$0xff]
        %v262 = vld [vmem:[%s176 + $0x188] sm:$0xff]
        %v263 = vld [vmem:[%s176 + $0x190] sm:$0xff]
        %v264 = vld [vmem:[%s176 + $0x198] sm:$0xff]
        %v265 = vld [vmem:[%s176 + $0x1a0] sm:$0xff]
        %v266 = vld [vmem:[%s176 + $0x1a8] sm:$0xff]
        %v267 = vld [vmem:[%s176 + $0x1b0] sm:$0xff]
        %v268 = vld [vmem:[%s176 + $0x1b8] sm:$0xff]
        %v269 = vld [vmem:[%s176 + $0x1c0] sm:$0xff]
        %v270 = vld [vmem:[%s176 + $0x1c8] sm:$0xff]
        %v271 = vld [vmem:[%s176 + $0x1d0] sm:$0xff]
        %v272 = vld [vmem:[%s176 + $0x1d8] sm:$0xff]
        %v273 = vld [vmem:[%s176 + $0x1e0] sm:$0xff]
        %v274 = vld [vmem:[%s176 + $0x1e8] sm:$0xff]
        %v275 = vld [vmem:[%s176 + $0x1f0] sm:$0xff]
        %v276 = vld [vmem:[%s176 + $0x1f8] sm:$0xff]
        %v277 = vld [vmem:[%s176 + $0x200] sm:$0xff]
        %v278 = vld [vmem:[%s176 + $0x208] sm:$0xff]
        %v279 = vld [vmem:[%s176 + $0x210] sm:$0xff]
        %v280 = vld [vmem:[%s176 + $0x218] sm:$0xff]
        %v281 = vld [vmem:[%s176 + $0x220] sm:$0xff]
        %v282 = vld [vmem:[%s176 + $0x228] sm:$0xff]
        %v283 = vld [vmem:[%s176 + $0x230] sm:$0xff]
        %v284 = vld [vmem:[%s176 + $0x238] sm:$0xff]
        %v285 = vld [vmem:[%s176 + $0x240] sm:$0xff]
        %v286 = vld [vmem:[%s176 + $0x248] sm:$0xff]
        %v287 = vld [vmem:[%s176 + $0x250] sm:$0xff]
        %v288 = vld [vmem:[%s176 + $0x258] sm:$0xff]
        %v289 = vld [vmem:[%s176 + $0x260] sm:$0xff]
        %v290 = vld [vmem:[%s176 + $0x268] sm:$0xff]
        %v291 = vld [vmem:[%s176 + $0x270] sm:$0xff]
        %v292 = vld [vmem:[%s176 + $0x278] sm:$0xff]
        %v293 = vld [vmem:[%s176 + $0x280] sm:$0xff]
        %v294 = vld [vmem:[%s176 + $0x288] sm:$0xff]
        %v295 = vld [vmem:[%s176 + $0x290] sm:$0xff]
        %v296 = vld [vmem:[%s176 + $0x298] sm:$0xff]
        %v297 = vld [vmem:[%s176 + $0x2a0] sm:$0xff]
        %v298 = vld [vmem:[%s176 + $0x2a8] sm:$0xff]
        %v299 = vld [vmem:[%s176 + $0x2b0] sm:$0xff]
        %v300 = vld [vmem:[%s176 + $0x2b8] sm:$0xff]
        %v301 = vld [vmem:[%s176 + $0x2c0] sm:$0xff]
        %v302 = vld [vmem:[%s176 + $0x2c8] sm:$0xff]
        %v303 = vld [vmem:[%s176 + $0x2d0] sm:$0xff]
        %v304 = vld [vmem:[%s176 + $0x2d8] sm:$0xff]
        %v305 = vld [vmem:[%s176 + $0x2e0] sm:$0xff]
        %v306 = vld [vmem:[%s176 + $0x2e8] sm:$0xff]
        %v307 = vld [vmem:[%s176 + $0x2f0] sm:$0xff]
        %v308 = vld [vmem:[%s176 + $0x2f8] sm:$0xff]
        %v309 = vld [vmem:[%s176 + $0x300] sm:$0xff]
        %v310 = vld [vmem:[%s176 + $0x308] sm:$0xff]
        %v311 = vld [vmem:[%s176 + $0x310] sm:$0xff]
        %v312 = vld [vmem:[%s176 + $0x318] sm:$0xff]
        %v313 = vld [vmem:[%s176 + $0x320] sm:$0xff]
        %v314 = vld [vmem:[%s176 + $0x328] sm:$0xff]
        %v315 = vld [vmem:[%s176 + $0x330] sm:$0xff]
        %v316 = vld [vmem:[%s176 + $0x338] sm:$0xff]
        %v317 = vld [vmem:[%s176 + $0x340] sm:$0xff]
        %v318 = vld [vmem:[%s176 + $0x348] sm:$0xff]
        %v319 = vld [vmem:[%s176 + $0x350] sm:$0xff]
        %v320 = vld [vmem:[%s176 + $0x358] sm:$0xff]
        %v321 = vld [vmem:[%s176 + $0x360] sm:$0xff]
        %v322 = vld [vmem:[%s176 + $0x368] sm:$0xff]
        %v323 = vld [vmem:[%s176 + $0x370] sm:$0xff]
        %v324 = vld [vmem:[%s176 + $0x378] sm:$0xff]
        %v325 = vld [vmem:[%s176 + $0x380] sm:$0xff]
        %v326 = vld [vmem:[%s176 + $0x388] sm:$0xff]
        %v327 = vld [vmem:[%s176 + $0x390] sm:$0xff]
        %v328 = vld [vmem:[%s176 + $0x398] sm:$0xff]
        %v329 = vld [vmem:[%s176 + $0x3a0] sm:$0xff]
        %v330 = vld [vmem:[%s176 + $0x3a8] sm:$0xff]
        %v331 = vld [vmem:[%s176 + $0x3b0] sm:$0xff]
        %v332 = vld [vmem:[%s176 + $0x3b8] sm:$0xff]
        %v333 = vld [vmem:[%s176 + $0x3c0] sm:$0xff]
        %v334 = vld [vmem:[%s176 + $0x3c8] sm:$0xff]
        %v335 = vld [vmem:[%s176 + $0x3d0] sm:$0xff]
        %v336 = vld [vmem:[%s176 + $0x3d8] sm:$0xff]
        %v337 = vld [vmem:[%s176 + $0x3e0] sm:$0xff]
        %v338 = vld [vmem:[%s176 + $0x3e8] sm:$0xff]
        %v339 = vld [vmem:[%s176 + $0x3f0] sm:$0xff]
        %v340 = vld [vmem:[%s176 + $0x3f8] sm:$0xff]
        %v341 = vld [vmem:[%s176 + $0x400] sm:$0xff]
        %v342 = vld [vmem:[%s176 + $0x408] sm:$0xff]
        %v343 = vld [vmem:[%s176 + $0x410] sm:$0xff]
        %v344 = vld [vmem:[%s176 + $0x418] sm:$0xff]
        %v345 = vld [vmem:[%s176 + $0x420] sm:$0xff]
        %v346 = vld [vmem:[%s176 + $0x428] sm:$0xff]
        %v347 = vld [vmem:[%s176 + $0x430] sm:$0xff]
        %v348 = vld [vmem:[%s176 + $0x438] sm:$0xff]
        %v349 = vld [vmem:[%s176 + $0x440] sm:$0xff]
        %v350 = vld [vmem:[%s176 + $0x448] sm:$0xff]
        %v351 = vld [vmem:[%s176 + $0x450] sm:$0xff]
        %v352 = vld [vmem:[%s176 + $0x458] sm:$0xff]
        %v353 = vld [vmem:[%s176 + $0x460] sm:$0xff]
        %v354 = vld [vmem:[%s176 + $0x468] sm:$0xff]
        %v355 = vld [vmem:[%s176 + $0x470] sm:$0xff]
        %v356 = vld [vmem:[%s176 + $0x478] sm:$0xff]
        %v357 = vld [vmem:[%s176 + $0x480] sm:$0xff]
        %v358 = vld [vmem:[%s176 + $0x488] sm:$0xff]
        %v359 = vld [vmem:[%s176 + $0x490] sm:$0xff]
        %v360 = vld [vmem:[%s176 + $0x498] sm:$0xff]
        %v361 = vld [vmem:[%s176 + $0x4a0] sm:$0xff]
        %v362 = vld [vmem:[%s176 + $0x4a8] sm:$0xff]
        %v363 = vld [vmem:[%s176 + $0x4b0] sm:$0xff]
        %v364 = vld [vmem:[%s176 + $0x4b8] sm:$0xff]
        %v365 = vld [vmem:[%s176 + $0x4c0] sm:$0xff]
        %v366 = vld [vmem:[%s176 + $0x4c8] sm:$0xff]
        %v367 = vld [vmem:[%s176 + $0x4d0] sm:$0xff]
        %v368 = vld [vmem:[%s176 + $0x4d8] sm:$0xff]
        %v369 = vld [vmem:[%s176 + $0x4e0] sm:$0xff]
        %v370 = vld [vmem:[%s176 + $0x4e8] sm:$0xff]
        %v371 = vld [vmem:[%s176 + $0x4f0] sm:$0xff]
        %v372 = vld [vmem:[%s176 + $0x4f8] sm:$0xff]
        %v373 = vld [vmem:[%s176 + $0x500] sm:$0xff]
        %v374 = vld [vmem:[%s176 + $0x508] sm:$0xff]
        %v375 = vld [vmem:[%s176 + $0x510] sm:$0xff]
        %v376 = vld [vmem:[%s176 + $0x518] sm:$0xff]
        %v377 = vld [vmem:[%s176 + $0x520] sm:$0xff]
        %v378 = vld [vmem:[%s176 + $0x528] sm:$0xff]
        %v379 = vld [vmem:[%s176 + $0x530] sm:$0xff]
        %v380 = vld [vmem:[%s176 + $0x538] sm:$0xff]
        %v381 = vld [vmem:[%s176 + $0x540] sm:$0xff]
        %v382 = vld [vmem:[%s176 + $0x548] sm:$0xff]
        %v383 = vld [vmem:[%s176 + $0x550] sm:$0xff]
        %v384 = vld [vmem:[%s176 + $0x558] sm:$0xff]
        %v385 = vld [vmem:[%s176 + $0x560] sm:$0xff]
        %v386 = vld [vmem:[%s176 + $0x568] sm:$0xff]
        %v387 = vld [vmem:[%s176 + $0x570] sm:$0xff]
        %v388 = vld [vmem:[%s176 + $0x578] sm:$0xff]
        %v389 = vld [vmem:[%s176 + $0x580] sm:$0xff]
        %v390 = vld [vmem:[%s176 + $0x588] sm:$0xff]
        %v391 = vld [vmem:[%s176 + $0x590] sm:$0xff]
        %v392 = vld [vmem:[%s176 + $0x598] sm:$0xff]
        %v393 = vld [vmem:[%s176 + $0x5a0] sm:$0xff]
        %v394 = vld [vmem:[%s176 + $0x5a8] sm:$0xff]
        %v395 = vld [vmem:[%s176 + $0x5b0] sm:$0xff]
        %v396 = vld [vmem:[%s176 + $0x5b8] sm:$0xff]
        %v397 = vld [vmem:[%s176 + $0x5c0] sm:$0xff]
        %v398 = vld [vmem:[%s176 + $0x5c8] sm:$0xff]
        %v399 = vld [vmem:[%s176 + $0x5d0] sm:$0xff]
        %v400 = vld [vmem:[%s176 + $0x5d8] sm:$0xff]
        %v401 = vld [vmem:[%s176 + $0x5e0] sm:$0xff]
        %v402 = vld [vmem:[%s176 + $0x5e8] sm:$0xff]
        %v403 = vld [vmem:[%s176 + $0x5f0] sm:$0xff]
        %v404 = vld [vmem:[%s176 + $0x5f8] sm:$0xff]
        %v405 = vld [vmem:[%s176 + $0x600] sm:$0xff]
        %v406 = vld [vmem:[%s176 + $0x608] sm:$0xff]
        %v407 = vld [vmem:[%s176 + $0x610] sm:$0xff]
        %v408 = vld [vmem:[%s176 + $0x618] sm:$0xff]
        %v409 = vld [vmem:[%s176 + $0x620] sm:$0xff]
        %v410 = vld [vmem:[%s176 + $0x628] sm:$0xff]
        %v411 = vld [vmem:[%s176 + $0x630] sm:$0xff]
        %v412 = vld [vmem:[%s176 + $0x638] sm:$0xff]
        %v413 = vld [vmem:[%s176 + $0x640] sm:$0xff]
        %v414 = vld [vmem:[%s176 + $0x648] sm:$0xff]
        %v415 = vld [vmem:[%s176 + $0x650] sm:$0xff]
        %v416 = vld [vmem:[%s176 + $0x658] sm:$0xff]
        %v417 = vld [vmem:[%s176 + $0x660] sm:$0xff]
        %v418 = vld [vmem:[%s176 + $0x668] sm:$0xff]
        %v419 = vld [vmem:[%s176 + $0x670] sm:$0xff]
        %v420 = vld [vmem:[%s176 + $0x678] sm:$0xff]
        %v421 = vld [vmem:[%s176 + $0x680] sm:$0xff]
        %v422 = vld [vmem:[%s176 + $0x688] sm:$0xff]
        %v423 = vld [vmem:[%s176 + $0x690] sm:$0xff]
        %v424 = vld [vmem:[%s176 + $0x698] sm:$0xff]
        %v425 = vld [vmem:[%s176 + $0x6a0] sm:$0xff]
        %v426 = vld [vmem:[%s176 + $0x6a8] sm:$0xff]
        %v427 = vld [vmem:[%s176 + $0x6b0] sm:$0xff]
        %v428 = vld [vmem:[%s176 + $0x6b8] sm:$0xff]
        %v429 = vld [vmem:[%s176 + $0x6c0] sm:$0xff]
        %v430 = vld [vmem:[%s176 + $0x6c8] sm:$0xff]
        %v431 = vld [vmem:[%s176 + $0x6d0] sm:$0xff]
        %v432 = vld [vmem:[%s176 + $0x6d8] sm:$0xff]
        %v433 = vld [vmem:[%s176 + $0x6e0] sm:$0xff]
        %v434 = vld [vmem:[%s176 + $0x6e8] sm:$0xff]
        %v435 = vld [vmem:[%s176 + $0x6f0] sm:$0xff]
        %v436 = vld [vmem:[%s176 + $0x6f8] sm:$0xff]
        %v437 = vld [vmem:[%s176 + $0x700] sm:$0xff]
        %v438 = vld [vmem:[%s176 + $0x708] sm:$0xff]
        %v439 = vld [vmem:[%s176 + $0x710] sm:$0xff]
        %v440 = vld [vmem:[%s176 + $0x718] sm:$0xff]
        %v441 = vld [vmem:[%s176 + $0x720] sm:$0xff]
        %v442 = vld [vmem:[%s176 + $0x728] sm:$0xff]
        %v443 = vld [vmem:[%s176 + $0x730] sm:$0xff]
        %v444 = vld [vmem:[%s176 + $0x738] sm:$0xff]
        %v445 = vld [vmem:[%s176 + $0x740] sm:$0xff]
        %v446 = vld [vmem:[%s176 + $0x748] sm:$0xff]
        %v447 = vld [vmem:[%s176 + $0x750] sm:$0xff]
        %v448 = vld [vmem:[%s176 + $0x758] sm:$0xff]
        %v449 = vld [vmem:[%s176 + $0x760] sm:$0xff]
        %v450 = vld [vmem:[%s176 + $0x768] sm:$0xff]
        %v451 = vld [vmem:[%s176 + $0x770] sm:$0xff]
        %v452 = vld [vmem:[%s176 + $0x778] sm:$0xff]
        %v453 = vld [vmem:[%s176 + $0x780] sm:$0xff]
        %v454 = vld [vmem:[%s176 + $0x788] sm:$0xff]
        %v455 = vld [vmem:[%s176 + $0x790] sm:$0xff]
        %v456 = vld [vmem:[%s176 + $0x798] sm:$0xff]
        %v457 = vld [vmem:[%s176 + $0x7a0] sm:$0xff]
        %v458 = vld [vmem:[%s176 + $0x7a8] sm:$0xff]
        %v459 = vld [vmem:[%s176 + $0x7b0] sm:$0xff]
        %v460 = vld [vmem:[%s176 + $0x7b8] sm:$0xff]
        %v461 = vld [vmem:[%s176 + $0x7c0] sm:$0xff]
        %v462 = vld [vmem:[%s176 + $0x7c8] sm:$0xff]
        %v463 = vld [vmem:[%s176 + $0x7d0] sm:$0xff]
        %v464 = vld [vmem:[%s176 + $0x7d8] sm:$0xff]
        %v465 = vld [vmem:[%s176 + $0x7e0] sm:$0xff]
        %v466 = vld [vmem:[%s176 + $0x7e8] sm:$0xff]
        %v467 = vld [vmem:[%s176 + $0x7f0] sm:$0xff]
        %v468 = vld [vmem:[%s176 + $0x7f8] sm:$0xff]
        %v469 = vld [vmem:[%s176 + $0x800] sm:$0xff]
        %v470 = vld [vmem:[%s176 + $0x808] sm:$0xff]
        %v471 = vld [vmem:[%s176 + $0x810] sm:$0xff]
        %v472 = vld [vmem:[%s176 + $0x818] sm:$0xff]
        %v473 = vld [vmem:[%s176 + $0x820] sm:$0xff]
        %v474 = vld [vmem:[%s176 + $0x828] sm:$0xff]
        %v475 = vld [vmem:[%s176 + $0x830] sm:$0xff]
        %v476 = vld [vmem:[%s176 + $0x838] sm:$0xff]
        %v477 = vld [vmem:[%s176 + $0x840] sm:$0xff]
        %v478 = vld [vmem:[%s176 + $0x848] sm:$0xff]
        %v479 = vld [vmem:[%s176 + $0x850] sm:$0xff]
        %v480 = vld [vmem:[%s176 + $0x858] sm:$0xff]
        %v481 = vld [vmem:[%s176 + $0x860] sm:$0xff]
        %v482 = vld [vmem:[%s176 + $0x868] sm:$0xff]
        %v483 = vld [vmem:[%s176 + $0x870] sm:$0xff]
        %v484 = vld [vmem:[%s176 + $0x878] sm:$0xff]
        %v485 = vld [vmem:[%s176 + $0x880] sm:$0xff]
        %v486 = vld [vmem:[%s176 + $0x888] sm:$0xff]
        %v487 = vld [vmem:[%s176 + $0x890] sm:$0xff]
        %v488 = vld [vmem:[%s176 + $0x898] sm:$0xff]
        %v489 = vld [vmem:[%s176 + $0x8a0] sm:$0xff]
        %v490 = vld [vmem:[%s176 + $0x8a8] sm:$0xff]
        %v491 = vld [vmem:[%s176 + $0x8b0] sm:$0xff]
        %v492 = vld [vmem:[%s176 + $0x8b8] sm:$0xff]
        %v493 = vld [vmem:[%s176 + $0x8c0] sm:$0xff]
        %v494 = vld [vmem:[%s176 + $0x8c8] sm:$0xff]
        %v495 = vld [vmem:[%s176 + $0x8d0] sm:$0xff]
        %v496 = vld [vmem:[%s176 + $0x8d8] sm:$0xff]
        %v497 = vld [vmem:[%s176 + $0x8e0] sm:$0xff]
        %v498 = vld [vmem:[%s176 + $0x8e8] sm:$0xff]
        %v499 = vld [vmem:[%s176 + $0x8f0] sm:$0xff]
        %v500 = vld [vmem:[%s176 + $0x8f8] sm:$0xff]
        %v501 = vstv %s211
        %v502 = vmul.f32 %v213, %v501
        %v503 = vmul.f32 %v214, %v501
        %v504 = vmul.f32 %v215, %v501
        %v505 = vmul.f32 %v216, %v501
        %v506 = vmul.f32 %v217, %v501
        %v507 = vmul.f32 %v218, %v501
        %v508 = vmul.f32 %v219, %v501
        %v509 = vmul.f32 %v220, %v501
        %v510 = vmul.f32 %v221, %v501
        %v511 = vmul.f32 %v222, %v501
        %v512 = vmul.f32 %v223, %v501
        %v513 = vmul.f32 %v224, %v501
        %v514 = vmul.f32 %v225, %v501
        %v515 = vmul.f32 %v226, %v501
        %v516 = vmul.f32 %v227, %v501
        %v517 = vmul.f32 %v228, %v501
        %v518 = vmul.f32 %v229, %v501
        %v519 = vmul.f32 %v230, %v501
        %v520 = vmul.f32 %v231, %v501
        %v521 = vmul.f32 %v232, %v501
        %v522 = vmul.f32 %v233, %v501
        %v523 = vmul.f32 %v234, %v501
        %v524 = vmul.f32 %v235, %v501
        %v525 = vmul.f32 %v236, %v501
        %v526 = vmul.f32 %v237, %v501
        %v527 = vmul.f32 %v238, %v501
        %v528 = vmul.f32 %v239, %v501
        %v529 = vmul.f32 %v240, %v501
        %v530 = vmul.f32 %v241, %v501
        %v531 = vmul.f32 %v242, %v501
        %v532 = vmul.f32 %v243, %v501
        %v533 = vmul.f32 %v244, %v501
        %v534 = vmul.f32 %v245, %v501
        %v535 = vmul.f32 %v246, %v501
        %v536 = vmul.f32 %v247, %v501
        %v537 = vmul.f32 %v248, %v501
        %v538 = vmul.f32 %v249, %v501
        %v539 = vmul.f32 %v250, %v501
        %v540 = vmul.f32 %v251, %v501
        %v541 = vmul.f32 %v252, %v501
        %v542 = vmul.f32 %v253, %v501
        %v543 = vmul.f32 %v254, %v501
        %v544 = vmul.f32 %v255, %v501
        %v545 = vmul.f32 %v256, %v501
        %v546 = vmul.f32 %v257, %v501
        %v547 = vmul.f32 %v258, %v501
        %v548 = vmul.f32 %v259, %v501
        %v549 = vmul.f32 %v260, %v501
        %v550 = vmul.f32 %v261, %v501
        %v551 = vmul.f32 %v262, %v501
        %v552 = vmul.f32 %v263, %v501
        %v553 = vmul.f32 %v264, %v501
        %v554 = vmul.f32 %v265, %v501
        %v555 = vmul.f32 %v266, %v501
        %v556 = vmul.f32 %v267, %v501
        %v557 = vmul.f32 %v268, %v501
        %v558 = vmul.f32 %v269, %v501
        %v559 = vmul.f32 %v270, %v501
        %v560 = vmul.f32 %v271, %v501
        %v561 = vmul.f32 %v272, %v501
        %v562 = vmul.f32 %v273, %v501
        %v563 = vmul.f32 %v274, %v501
        %v564 = vmul.f32 %v275, %v501
        %v565 = vmul.f32 %v276, %v501
        %v566 = vmul.f32 %v277, %v501
        %v567 = vmul.f32 %v278, %v501
        %v568 = vmul.f32 %v279, %v501
        %v569 = vmul.f32 %v280, %v501
        %v570 = vmul.f32 %v281, %v501
        %v571 = vmul.f32 %v282, %v501
        %v572 = vmul.f32 %v283, %v501
        %v573 = vmul.f32 %v284, %v501
        %v574 = vmul.f32 %v285, %v501
        %v575 = vmul.f32 %v286, %v501
        %v576 = vmul.f32 %v287, %v501
        %v577 = vmul.f32 %v288, %v501
        %v578 = vmul.f32 %v289, %v501
        %v579 = vmul.f32 %v290, %v501
        %v580 = vmul.f32 %v291, %v501
        %v581 = vmul.f32 %v292, %v501
        %v582 = vmul.f32 %v293, %v501
        %v583 = vmul.f32 %v294, %v501
        %v584 = vmul.f32 %v295, %v501
        %v585 = vmul.f32 %v296, %v501
        %v586 = vmul.f32 %v297, %v501
        %v587 = vmul.f32 %v298, %v501
        %v588 = vmul.f32 %v299, %v501
        %v589 = vmul.f32 %v300, %v501
        %v590 = vmul.f32 %v301, %v501
        %v591 = vmul.f32 %v302, %v501
        %v592 = vmul.f32 %v303, %v501
        %v593 = vmul.f32 %v304, %v501
        %v594 = vmul.f32 %v305, %v501
        %v595 = vmul.f32 %v306, %v501
        %v596 = vmul.f32 %v307, %v501
        %v597 = vmul.f32 %v308, %v501
        %v598 = vmul.f32 %v309, %v501
        %v599 = vmul.f32 %v310, %v501
        %v600 = vmul.f32 %v311, %v501
        %v601 = vmul.f32 %v312, %v501
        %v602 = vmul.f32 %v313, %v501
        %v603 = vmul.f32 %v314, %v501
        %v604 = vmul.f32 %v315, %v501
        %v605 = vmul.f32 %v316, %v501
        %v606 = vmul.f32 %v317, %v501
        %v607 = vmul.f32 %v318, %v501
        %v608 = vmul.f32 %v319, %v501
        %v609 = vmul.f32 %v320, %v501
        %v610 = vmul.f32 %v321, %v501
        %v611 = vmul.f32 %v322, %v501
        %v612 = vmul.f32 %v323, %v501
        %v613 = vmul.f32 %v324, %v501
        %v614 = vmul.f32 %v325, %v501
        %v615 = vmul.f32 %v326, %v501
        %v616 = vmul.f32 %v327, %v501
        %v617 = vmul.f32 %v328, %v501
        %v618 = vmul.f32 %v329, %v501
        %v619 = vmul.f32 %v330, %v501
        %v620 = vmul.f32 %v331, %v501
        %v621 = vmul.f32 %v332, %v501
        %v622 = vmul.f32 %v333, %v501
        %v623 = vmul.f32 %v334, %v501
        %v624 = vmul.f32 %v335, %v501
        %v625 = vmul.f32 %v336, %v501
        %v626 = vmul.f32 %v337, %v501
        %v627 = vmul.f32 %v338, %v501
        %v628 = vmul.f32 %v339, %v501
        %v629 = vmul.f32 %v340, %v501
        %v630 = vmul.f32 %v341, %v501
        %v631 = vmul.f32 %v342, %v501
        %v632 = vmul.f32 %v343, %v501
        %v633 = vmul.f32 %v344, %v501
        %v634 = vmul.f32 %v345, %v501
        %v635 = vmul.f32 %v346, %v501
        %v636 = vmul.f32 %v347, %v501
        %v637 = vmul.f32 %v348, %v501
        %v638 = vmul.f32 %v349, %v501
        %v639 = vmul.f32 %v350, %v501
        %v640 = vmul.f32 %v351, %v501
        %v641 = vmul.f32 %v352, %v501
        %v642 = vmul.f32 %v353, %v501
        %v643 = vmul.f32 %v354, %v501
        %v644 = vmul.f32 %v355, %v501
        %v645 = vmul.f32 %v356, %v501
        %v646 = vmul.f32 %v357, %v501
        %v647 = vmul.f32 %v358, %v501
        %v648 = vmul.f32 %v359, %v501
        %v649 = vmul.f32 %v360, %v501
        %v650 = vmul.f32 %v361, %v501
        %v651 = vmul.f32 %v362, %v501
        %v652 = vmul.f32 %v363, %v501
        %v653 = vmul.f32 %v364, %v501
        %v654 = vmul.f32 %v365, %v501
        %v655 = vmul.f32 %v366, %v501
        %v656 = vmul.f32 %v367, %v501
        %v657 = vmul.f32 %v368, %v501
        %v658 = vmul.f32 %v369, %v501
        %v659 = vmul.f32 %v370, %v501
        %v660 = vmul.f32 %v371, %v501
        %v661 = vmul.f32 %v372, %v501
        %v662 = vmul.f32 %v373, %v501
        %v663 = vmul.f32 %v374, %v501
        %v664 = vmul.f32 %v375, %v501
        %v665 = vmul.f32 %v376, %v501
        %v666 = vmul.f32 %v377, %v501
        %v667 = vmul.f32 %v378, %v501
        %v668 = vmul.f32 %v379, %v501
        %v669 = vmul.f32 %v380, %v501
        %v670 = vmul.f32 %v381, %v501
        %v671 = vmul.f32 %v382, %v501
        %v672 = vmul.f32 %v383, %v501
        %v673 = vmul.f32 %v384, %v501
        %v674 = vmul.f32 %v385, %v501
        %v675 = vmul.f32 %v386, %v501
        %v676 = vmul.f32 %v387, %v501
        %v677 = vmul.f32 %v388, %v501
        %v678 = vmul.f32 %v389, %v501
        %v679 = vmul.f32 %v390, %v501
        %v680 = vmul.f32 %v391, %v501
        %v681 = vmul.f32 %v392, %v501
        %v682 = vmul.f32 %v393, %v501
        %v683 = vmul.f32 %v394, %v501
        %v684 = vmul.f32 %v395, %v501
        %v685 = vmul.f32 %v396, %v501
        %v686 = vmul.f32 %v397, %v501
        %v687 = vmul.f32 %v398, %v501
        %v688 = vmul.f32 %v399, %v501
        %v689 = vmul.f32 %v400, %v501
        %v690 = vmul.f32 %v401, %v501
        %v691 = vmul.f32 %v402, %v501
        %v692 = vmul.f32 %v403, %v501
        %v693 = vmul.f32 %v404, %v501
        %v694 = vmul.f32 %v405, %v501
        %v695 = vmul.f32 %v406, %v501
        %v696 = vmul.f32 %v407, %v501
        %v697 = vmul.f32 %v408, %v501
        %v698 = vmul.f32 %v409, %v501
        %v699 = vmul.f32 %v410, %v501
        %v700 = vmul.f32 %v411, %v501
        %v701 = vmul.f32 %v412, %v501
        %v702 = vmul.f32 %v413, %v501
        %v703 = vmul.f32 %v414, %v501
        %v704 = vmul.f32 %v415, %v501
        %v705 = vmul.f32 %v416, %v501
        %v706 = vmul.f32 %v417, %v501
        %v707 = vmul.f32 %v418, %v501
        %v708 = vmul.f32 %v419, %v501
        %v709 = vmul.f32 %v420, %v501
        %v710 = vmul.f32 %v421, %v501
        %v711 = vmul.f32 %v422, %v501
        %v712 = vmul.f32 %v423, %v501
        %v713 = vmul.f32 %v424, %v501
        %v714 = vmul.f32 %v425, %v501
        %v715 = vmul.f32 %v426, %v501
        %v716 = vmul.f32 %v427, %v501
        %v717 = vmul.f32 %v428, %v501
        %v718 = vmul.f32 %v429, %v501
        %v719 = vmul.f32 %v430, %v501
        %v720 = vmul.f32 %v431, %v501
        %v721 = vmul.f32 %v432, %v501
        %v722 = vmul.f32 %v433, %v501
        %v723 = vmul.f32 %v434, %v501
        %v724 = vmul.f32 %v435, %v501
        %v725 = vmul.f32 %v436, %v501
        %v726 = vmul.f32 %v437, %v501
        %v727 = vmul.f32 %v438, %v501
        %v728 = vmul.f32 %v439, %v501
        %v729 = vmul.f32 %v440, %v501
        %v730 = vmul.f32 %v441, %v501
        %v731 = vmul.f32 %v442, %v501
        %v732 = vmul.f32 %v443, %v501
        %v733 = vmul.f32 %v444, %v501
        %v734 = vmul.f32 %v445, %v501
        %v735 = vmul.f32 %v446, %v501
        %v736 = vmul.f32 %v447, %v501
        %v737 = vmul.f32 %v448, %v501
        %v738 = vmul.f32 %v449, %v501
        %v739 = vmul.f32 %v450, %v501
        %v740 = vmul.f32 %v451, %v501
        %v741 = vmul.f32 %v452, %v501
        %v742 = vmul.f32 %v453, %v501
        %v743 = vmul.f32 %v454, %v501
        %v744 = vmul.f32 %v455, %v501
        %v745 = vmul.f32 %v456, %v501
        %v746 = vmul.f32 %v457, %v501
        %v747 = vmul.f32 %v458, %v501
        %v748 = vmul.f32 %v459, %v501
        %v749 = vmul.f32 %v460, %v501
        %v750 = vmul.f32 %v461, %v501
        %v751 = vmul.f32 %v462, %v501
        %v752 = vmul.f32 %v463, %v501
        %v753 = vmul.f32 %v464, %v501
        %v754 = vmul.f32 %v465, %v501
        %v755 = vmul.f32 %v466, %v501
        %v756 = vmul.f32 %v467, %v501
        %v757 = vmul.f32 %v468, %v501
        %v758 = vmul.f32 %v469, %v501
        %v759 = vmul.f32 %v470, %v501
        %v760 = vmul.f32 %v471, %v501
        %v761 = vmul.f32 %v472, %v501
        %v762 = vmul.f32 %v473, %v501
        %v763 = vmul.f32 %v474, %v501
        %v764 = vmul.f32 %v475, %v501
        %v765 = vmul.f32 %v476, %v501
        %v766 = vmul.f32 %v477, %v501
        %v767 = vmul.f32 %v478, %v501
        %v768 = vmul.f32 %v479, %v501
        %v769 = vmul.f32 %v480, %v501
        %v770 = vmul.f32 %v481, %v501
        %v771 = vmul.f32 %v482, %v501
        %v772 = vmul.f32 %v483, %v501
        %v773 = vmul.f32 %v484, %v501
        %v774 = vmul.f32 %v485, %v501
        %v775 = vmul.f32 %v486, %v501
        %v776 = vmul.f32 %v487, %v501
        %v777 = vmul.f32 %v488, %v501
        %v778 = vmul.f32 %v489, %v501
        %v779 = vmul.f32 %v490, %v501
        %v780 = vmul.f32 %v491, %v501
        %v781 = vmul.f32 %v492, %v501
        %v782 = vmul.f32 %v493, %v501
        %v783 = vmul.f32 %v494, %v501
        %v784 = vmul.f32 %v495, %v501
        %v785 = vmul.f32 %v496, %v501
        %v786 = vmul.f32 %v497, %v501
        %v787 = vmul.f32 %v498, %v501
        %v788 = vmul.f32 %v499, %v501
        %v789 = vmul.f32 %v500, %v501
        %v790 = vstv %s212
        %v791 = vadd.f32 %v502, %v790
        %v792 = vadd.f32 %v503, %v790
        %v793 = vadd.f32 %v504, %v790
        %v794 = vadd.f32 %v505, %v790
        %v795 = vadd.f32 %v506, %v790
        %v796 = vadd.f32 %v507, %v790
        %v797 = vadd.f32 %v508, %v790
        %v798 = vadd.f32 %v509, %v790
        %v799 = vadd.f32 %v510, %v790
        %v800 = vadd.f32 %v511, %v790
        %v801 = vadd.f32 %v512, %v790
        %v802 = vadd.f32 %v513, %v790
        %v803 = vadd.f32 %v514, %v790
        %v804 = vadd.f32 %v515, %v790
        %v805 = vadd.f32 %v516, %v790
        %v806 = vadd.f32 %v517, %v790
        %v807 = vadd.f32 %v518, %v790
        %v808 = vadd.f32 %v519, %v790
        %v809 = vadd.f32 %v520, %v790
        %v810 = vadd.f32 %v521, %v790
        %v811 = vadd.f32 %v522, %v790
        %v812 = vadd.f32 %v523, %v790
        %v813 = vadd.f32 %v524, %v790
        %v814 = vadd.f32 %v525, %v790
        %v815 = vadd.f32 %v526, %v790
        %v816 = vadd.f32 %v527, %v790
        %v817 = vadd.f32 %v528, %v790
        %v818 = vadd.f32 %v529, %v790
        %v819 = vadd.f32 %v530, %v790
        %v820 = vadd.f32 %v531, %v790
        %v821 = vadd.f32 %v532, %v790
        %v822 = vadd.f32 %v533, %v790
        %v823 = vadd.f32 %v534, %v790
        %v824 = vadd.f32 %v535, %v790
        %v825 = vadd.f32 %v536, %v790
        %v826 = vadd.f32 %v537, %v790
        %v827 = vadd.f32 %v538, %v790
        %v828 = vadd.f32 %v539, %v790
        %v829 = vadd.f32 %v540, %v790
        %v830 = vadd.f32 %v541, %v790
        %v831 = vadd.f32 %v542, %v790
        %v832 = vadd.f32 %v543, %v790
        %v833 = vadd.f32 %v544, %v790
        %v834 = vadd.f32 %v545, %v790
        %v835 = vadd.f32 %v546, %v790
        %v836 = vadd.f32 %v547, %v790
        %v837 = vadd.f32 %v548, %v790
        %v838 = vadd.f32 %v549, %v790
        %v839 = vadd.f32 %v550, %v790
        %v840 = vadd.f32 %v551, %v790
        %v841 = vadd.f32 %v552, %v790
        %v842 = vadd.f32 %v553, %v790
        %v843 = vadd.f32 %v554, %v790
        %v844 = vadd.f32 %v555, %v790
        %v845 = vadd.f32 %v556, %v790
        %v846 = vadd.f32 %v557, %v790
        %v847 = vadd.f32 %v558, %v790
        %v848 = vadd.f32 %v559, %v790
        %v849 = vadd.f32 %v560, %v790
        %v850 = vadd.f32 %v561, %v790
        %v851 = vadd.f32 %v562, %v790
        %v852 = vadd.f32 %v563, %v790
        %v853 = vadd.f32 %v564, %v790
        %v854 = vadd.f32 %v565, %v790
        %v855 = vadd.f32 %v566, %v790
        %v856 = vadd.f32 %v567, %v790
        %v857 = vadd.f32 %v568, %v790
        %v858 = vadd.f32 %v569, %v790
        %v859 = vadd.f32 %v570, %v790
        %v860 = vadd.f32 %v571, %v790
        %v861 = vadd.f32 %v572, %v790
        %v862 = vadd.f32 %v573, %v790
        %v863 = vadd.f32 %v574, %v790
        %v864 = vadd.f32 %v575, %v790
        %v865 = vadd.f32 %v576, %v790
        %v866 = vadd.f32 %v577, %v790
        %v867 = vadd.f32 %v578, %v790
        %v868 = vadd.f32 %v579, %v790
        %v869 = vadd.f32 %v580, %v790
        %v870 = vadd.f32 %v581, %v790
        %v871 = vadd.f32 %v582, %v790
        %v872 = vadd.f32 %v583, %v790
        %v873 = vadd.f32 %v584, %v790
        %v874 = vadd.f32 %v585, %v790
        %v875 = vadd.f32 %v586, %v790
        %v876 = vadd.f32 %v587, %v790
        %v877 = vadd.f32 %v588, %v790
        %v878 = vadd.f32 %v589, %v790
        %v879 = vadd.f32 %v590, %v790
        %v880 = vadd.f32 %v591, %v790
        %v881 = vadd.f32 %v592, %v790
        %v882 = vadd.f32 %v593, %v790
        %v883 = vadd.f32 %v594, %v790
        %v884 = vadd.f32 %v595, %v790
        %v885 = vadd.f32 %v596, %v790
        %v886 = vadd.f32 %v597, %v790
        %v887 = vadd.f32 %v598, %v790
        %v888 = vadd.f32 %v599, %v790
        %v889 = vadd.f32 %v600, %v790
        %v890 = vadd.f32 %v601, %v790
        %v891 = vadd.f32 %v602, %v790
        %v892 = vadd.f32 %v603, %v790
        %v893 = vadd.f32 %v604, %v790
        %v894 = vadd.f32 %v605, %v790
        %v895 = vadd.f32 %v606, %v790
        %v896 = vadd.f32 %v607, %v790
        %v897 = vadd.f32 %v608, %v790
        %v898 = vadd.f32 %v609, %v790
        %v899 = vadd.f32 %v610, %v790
        %v900 = vadd.f32 %v611, %v790
        %v901 = vadd.f32 %v612, %v790
        %v902 = vadd.f32 %v613, %v790
        %v903 = vadd.f32 %v614, %v790
        %v904 = vadd.f32 %v615, %v790
        %v905 = vadd.f32 %v616, %v790
        %v906 = vadd.f32 %v617, %v790
        %v907 = vadd.f32 %v618, %v790
        %v908 = vadd.f32 %v619, %v790
        %v909 = vadd.f32 %v620, %v790
        %v910 = vadd.f32 %v621, %v790
        %v911 = vadd.f32 %v622, %v790
        %v912 = vadd.f32 %v623, %v790
        %v913 = vadd.f32 %v624, %v790
        %v914 = vadd.f32 %v625, %v790
        %v915 = vadd.f32 %v626, %v790
        %v916 = vadd.f32 %v627, %v790
        %v917 = vadd.f32 %v628, %v790
        %v918 = vadd.f32 %v629, %v790
        %v919 = vadd.f32 %v630, %v790
        %v920 = vadd.f32 %v631, %v790
        %v921 = vadd.f32 %v632, %v790
        %v922 = vadd.f32 %v633, %v790
        %v923 = vadd.f32 %v634, %v790
        %v924 = vadd.f32 %v635, %v790
        %v925 = vadd.f32 %v636, %v790
        %v926 = vadd.f32 %v637, %v790
        %v927 = vadd.f32 %v638, %v790
        %v928 = vadd.f32 %v639, %v790
        %v929 = vadd.f32 %v640, %v790
        %v930 = vadd.f32 %v641, %v790
        %v931 = vadd.f32 %v642, %v790
        %v932 = vadd.f32 %v643, %v790
        %v933 = vadd.f32 %v644, %v790
        %v934 = vadd.f32 %v645, %v790
        %v935 = vadd.f32 %v646, %v790
        %v936 = vadd.f32 %v647, %v790
        %v937 = vadd.f32 %v648, %v790
        %v938 = vadd.f32 %v649, %v790
        %v939 = vadd.f32 %v650, %v790
        %v940 = vadd.f32 %v651, %v790
        %v941 = vadd.f32 %v652, %v790
        %v942 = vadd.f32 %v653, %v790
        %v943 = vadd.f32 %v654, %v790
        %v944 = vadd.f32 %v655, %v790
        %v945 = vadd.f32 %v656, %v790
        %v946 = vadd.f32 %v657, %v790
        %v947 = vadd.f32 %v658, %v790
        %v948 = vadd.f32 %v659, %v790
        %v949 = vadd.f32 %v660, %v790
        %v950 = vadd.f32 %v661, %v790
        %v951 = vadd.f32 %v662, %v790
        %v952 = vadd.f32 %v663, %v790
        %v953 = vadd.f32 %v664, %v790
        %v954 = vadd.f32 %v665, %v790
        %v955 = vadd.f32 %v666, %v790
        %v956 = vadd.f32 %v667, %v790
        %v957 = vadd.f32 %v668, %v790
        %v958 = vadd.f32 %v669, %v790
        %v959 = vadd.f32 %v670, %v790
        %v960 = vadd.f32 %v671, %v790
        %v961 = vadd.f32 %v672, %v790
        %v962 = vadd.f32 %v673, %v790
        %v963 = vadd.f32 %v674, %v790
        %v964 = vadd.f32 %v675, %v790
        %v965 = vadd.f32 %v676, %v790
        %v966 = vadd.f32 %v677, %v790
        %v967 = vadd.f32 %v678, %v790
        %v968 = vadd.f32 %v679, %v790
        %v969 = vadd.f32 %v680, %v790
        %v970 = vadd.f32 %v681, %v790
        %v971 = vadd.f32 %v682, %v790
        %v972 = vadd.f32 %v683, %v790
        %v973 = vadd.f32 %v684, %v790
        %v974 = vadd.f32 %v685, %v790
        %v975 = vadd.f32 %v686, %v790
        %v976 = vadd.f32 %v687, %v790
        %v977 = vadd.f32 %v688, %v790
        %v978 = vadd.f32 %v689, %v790
        %v979 = vadd.f32 %v690, %v790
        %v980 = vadd.f32 %v691, %v790
        %v981 = vadd.f32 %v692, %v790
        %v982 = vadd.f32 %v693, %v790
        %v983 = vadd.f32 %v694, %v790
        %v984 = vadd.f32 %v695, %v790
        %v985 = vadd.f32 %v696, %v790
        %v986 = vadd.f32 %v697, %v790
        %v987 = vadd.f32 %v698, %v790
        %v988 = vadd.f32 %v699, %v790
        %v989 = vadd.f32 %v700, %v790
        %v990 = vadd.f32 %v701, %v790
        %v991 = vadd.f32 %v702, %v790
        %v992 = vadd.f32 %v703, %v790
        %v993 = vadd.f32 %v704, %v790
        %v994 = vadd.f32 %v705, %v790
        %v995 = vadd.f32 %v706, %v790
        %v996 = vadd.f32 %v707, %v790
        %v997 = vadd.f32 %v708, %v790
        %v998 = vadd.f32 %v709, %v790
        %v999 = vadd.f32 %v710, %v790
        %v1000 = vadd.f32 %v711, %v790
        %v1001 = vadd.f32 %v712, %v790
        %v1002 = vadd.f32 %v713, %v790
        %v1003 = vadd.f32 %v714, %v790
        %v1004 = vadd.f32 %v715, %v790
        %v1005 = vadd.f32 %v716, %v790
        %v1006 = vadd.f32 %v717, %v790
        %v1007 = vadd.f32 %v718, %v790
        %v1008 = vadd.f32 %v719, %v790
        %v1009 = vadd.f32 %v720, %v790
        %v1010 = vadd.f32 %v721, %v790
        %v1011 = vadd.f32 %v722, %v790
        %v1012 = vadd.f32 %v723, %v790
        %v1013 = vadd.f32 %v724, %v790
        %v1014 = vadd.f32 %v725, %v790
        %v1015 = vadd.f32 %v726, %v790
        %v1016 = vadd.f32 %v727, %v790
        %v1017 = vadd.f32 %v728, %v790
        %v1018 = vadd.f32 %v729, %v790
        %v1019 = vadd.f32 %v730, %v790
        %v1020 = vadd.f32 %v731, %v790
        %v1021 = vadd.f32 %v732, %v790
        %v1022 = vadd.f32 %v733, %v790
        %v1023 = vadd.f32 %v734, %v790
        %v1024 = vadd.f32 %v735, %v790
        %v1025 = vadd.f32 %v736, %v790
        %v1026 = vadd.f32 %v737, %v790
        %v1027 = vadd.f32 %v738, %v790
        %v1028 = vadd.f32 %v739, %v790
        %v1029 = vadd.f32 %v740, %v790
        %v1030 = vadd.f32 %v741, %v790
        %v1031 = vadd.f32 %v742, %v790
        %v1032 = vadd.f32 %v743, %v790
        %v1033 = vadd.f32 %v744, %v790
        %v1034 = vadd.f32 %v745, %v790
        %v1035 = vadd.f32 %v746, %v790
        %v1036 = vadd.f32 %v747, %v790
        %v1037 = vadd.f32 %v748, %v790
        %v1038 = vadd.f32 %v749, %v790
        %v1039 = vadd.f32 %v750, %v790
        %v1040 = vadd.f32 %v751, %v790
        %v1041 = vadd.f32 %v752, %v790
        %v1042 = vadd.f32 %v753, %v790
        %v1043 = vadd.f32 %v754, %v790
        %v1044 = vadd.f32 %v755, %v790
        %v1045 = vadd.f32 %v756, %v790
        %v1046 = vadd.f32 %v757, %v790
        %v1047 = vadd.f32 %v758, %v790
        %v1048 = vadd.f32 %v759, %v790
        %v1049 = vadd.f32 %v760, %v790
        %v1050 = vadd.f32 %v761, %v790
        %v1051 = vadd.f32 %v762, %v790
        %v1052 = vadd.f32 %v763, %v790
        %v1053 = vadd.f32 %v764, %v790
        %v1054 = vadd.f32 %v765, %v790
        %v1055 = vadd.f32 %v766, %v790
        %v1056 = vadd.f32 %v767, %v790
        %v1057 = vadd.f32 %v768, %v790
        %v1058 = vadd.f32 %v769, %v790
        %v1059 = vadd.f32 %v770, %v790
        %v1060 = vadd.f32 %v771, %v790
        %v1061 = vadd.f32 %v772, %v790
        %v1062 = vadd.f32 %v773, %v790
        %v1063 = vadd.f32 %v774, %v790
        %v1064 = vadd.f32 %v775, %v790
        %v1065 = vadd.f32 %v776, %v790
        %v1066 = vadd.f32 %v777, %v790
        %v1067 = vadd.f32 %v778, %v790
        %v1068 = vadd.f32 %v779, %v790
        %v1069 = vadd.f32 %v780, %v790
        %v1070 = vadd.f32 %v781, %v790
        %v1071 = vadd.f32 %v782, %v790
        %v1072 = vadd.f32 %v783, %v790
        %v1073 = vadd.f32 %v784, %v790
        %v1074 = vadd.f32 %v785, %v790
        %v1075 = vadd.f32 %v786, %v790
        %v1076 = vadd.f32 %v787, %v790
        %v1077 = vadd.f32 %v788, %v790
        %v1078 = vadd.f32 %v789, %v790
        %1079 = vst [vmem:[%s198] sm:$0xff] %v791
        %1080 = vst [vmem:[%s198 + $0x8] sm:$0xff] %v792
        %1081 = vst [vmem:[%s198 + $0x10] sm:$0xff] %v793
        %1082 = vst [vmem:[%s198 + $0x18] sm:$0xff] %v794
        %1083 = vst [vmem:[%s198 + $0x20] sm:$0xff] %v795
        %1084 = vst [vmem:[%s198 + $0x28] sm:$0xff] %v796
        %1085 = vst [vmem:[%s198 + $0x30] sm:$0xff] %v797
        %1086 = vst [vmem:[%s198 + $0x38] sm:$0xff] %v798
        %1087 = vst [vmem:[%s198 + $0x40] sm:$0xff] %v799
        %1088 = vst [vmem:[%s198 + $0x48] sm:$0xff] %v800
        %1089 = vst [vmem:[%s198 + $0x50] sm:$0xff] %v801
        %1090 = vst [vmem:[%s198 + $0x58] sm:$0xff] %v802
        %1091 = vst [vmem:[%s198 + $0x60] sm:$0xff] %v803
        %1092 = vst [vmem:[%s198 + $0x68] sm:$0xff] %v804
        %1093 = vst [vmem:[%s198 + $0x70] sm:$0xff] %v805
        %1094 = vst [vmem:[%s198 + $0x78] sm:$0xff] %v806
        %1095 = vst [vmem:[%s198 + $0x80] sm:$0xff] %v807
        %1096 = vst [vmem:[%s198 + $0x88] sm:$0xff] %v808
        %1097 = vst [vmem:[%s198 + $0x90] sm:$0xff] %v809
        %1098 = vst [vmem:[%s198 + $0x98] sm:$0xff] %v810
        %1099 = vst [vmem:[%s198 + $0xa0] sm:$0xff] %v811
        %1100 = vst [vmem:[%s198 + $0xa8] sm:$0xff] %v812
        %1101 = vst [vmem:[%s198 + $0xb0] sm:$0xff] %v813
        %1102 = vst [vmem:[%s198 + $0xb8] sm:$0xff] %v814
        %1103 = vst [vmem:[%s198 + $0xc0] sm:$0xff] %v815
        %1104 = vst [vmem:[%s198 + $0xc8] sm:$0xff] %v816
        %1105 = vst [vmem:[%s198 + $0xd0] sm:$0xff] %v817
        %1106 = vst [vmem:[%s198 + $0xd8] sm:$0xff] %v818
        %1107 = vst [vmem:[%s198 + $0xe0] sm:$0xff] %v819
        %1108 = vst [vmem:[%s198 + $0xe8] sm:$0xff] %v820
        %1109 = vst [vmem:[%s198 + $0xf0] sm:$0xff] %v821
        %1110 = vst [vmem:[%s198 + $0xf8] sm:$0xff] %v822
        %1111 = vst [vmem:[%s198 + $0x100] sm:$0xff] %v823
        %1112 = vst [vmem:[%s198 + $0x108] sm:$0xff] %v824
        %1113 = vst [vmem:[%s198 + $0x110] sm:$0xff] %v825
        %1114 = vst [vmem:[%s198 + $0x118] sm:$0xff] %v826
        %1115 = vst [vmem:[%s198 + $0x120] sm:$0xff] %v827
        %1116 = vst [vmem:[%s198 + $0x128] sm:$0xff] %v828
        %1117 = vst [vmem:[%s198 + $0x130] sm:$0xff] %v829
        %1118 = vst [vmem:[%s198 + $0x138] sm:$0xff] %v830
        %1119 = vst [vmem:[%s198 + $0x140] sm:$0xff] %v831
        %1120 = vst [vmem:[%s198 + $0x148] sm:$0xff] %v832
        %1121 = vst [vmem:[%s198 + $0x150] sm:$0xff] %v833
        %1122 = vst [vmem:[%s198 + $0x158] sm:$0xff] %v834
        %1123 = vst [vmem:[%s198 + $0x160] sm:$0xff] %v835
        %1124 = vst [vmem:[%s198 + $0x168] sm:$0xff] %v836
        %1125 = vst [vmem:[%s198 + $0x170] sm:$0xff] %v837
        %1126 = vst [vmem:[%s198 + $0x178] sm:$0xff] %v838
        %1127 = vst [vmem:[%s198 + $0x180] sm:$0xff] %v839
        %1128 = vst [vmem:[%s198 + $0x188] sm:$0xff] %v840
        %1129 = vst [vmem:[%s198 + $0x190] sm:$0xff] %v841
        %1130 = vst [vmem:[%s198 + $0x198] sm:$0xff] %v842
        %1131 = vst [vmem:[%s198 + $0x1a0] sm:$0xff] %v843
        %1132 = vst [vmem:[%s198 + $0x1a8] sm:$0xff] %v844
        %1133 = vst [vmem:[%s198 + $0x1b0] sm:$0xff] %v845
        %1134 = vst [vmem:[%s198 + $0x1b8] sm:$0xff] %v846
        %1135 = vst [vmem:[%s198 + $0x1c0] sm:$0xff] %v847
        %1136 = vst [vmem:[%s198 + $0x1c8] sm:$0xff] %v848
        %1137 = vst [vmem:[%s198 + $0x1d0] sm:$0xff] %v849
        %1138 = vst [vmem:[%s198 + $0x1d8] sm:$0xff] %v850
        %1139 = vst [vmem:[%s198 + $0x1e0] sm:$0xff] %v851
        %1140 = vst [vmem:[%s198 + $0x1e8] sm:$0xff] %v852
        %1141 = vst [vmem:[%s198 + $0x1f0] sm:$0xff] %v853
        %1142 = vst [vmem:[%s198 + $0x1f8] sm:$0xff] %v854
        %1143 = vst [vmem:[%s198 + $0x200] sm:$0xff] %v855
        %1144 = vst [vmem:[%s198 + $0x208] sm:$0xff] %v856
        %1145 = vst [vmem:[%s198 + $0x210] sm:$0xff] %v857
        %1146 = vst [vmem:[%s198 + $0x218] sm:$0xff] %v858
        %1147 = vst [vmem:[%s198 + $0x220] sm:$0xff] %v859
        %1148 = vst [vmem:[%s198 + $0x228] sm:$0xff] %v860
        %1149 = vst [vmem:[%s198 + $0x230] sm:$0xff] %v861
        %1150 = vst [vmem:[%s198 + $0x238] sm:$0xff] %v862
        %1151 = vst [vmem:[%s198 + $0x240] sm:$0xff] %v863
        %1152 = vst [vmem:[%s198 + $0x248] sm:$0xff] %v864
        %1153 = vst [vmem:[%s198 + $0x250] sm:$0xff] %v865
        %1154 = vst [vmem:[%s198 + $0x258] sm:$0xff] %v866
        %1155 = vst [vmem:[%s198 + $0x260] sm:$0xff] %v867
        %1156 = vst [vmem:[%s198 + $0x268] sm:$0xff] %v868
        %1157 = vst [vmem:[%s198 + $0x270] sm:$0xff] %v869
        %1158 = vst [vmem:[%s198 + $0x278] sm:$0xff] %v870
        %1159 = vst [vmem:[%s198 + $0x280] sm:$0xff] %v871
        %1160 = vst [vmem:[%s198 + $0x288] sm:$0xff] %v872
        %1161 = vst [vmem:[%s198 + $0x290] sm:$0xff] %v873
        %1162 = vst [vmem:[%s198 + $0x298] sm:$0xff] %v874
        %1163 = vst [vmem:[%s198 + $0x2a0] sm:$0xff] %v875
        %1164 = vst [vmem:[%s198 + $0x2a8] sm:$0xff] %v876
        %1165 = vst [vmem:[%s198 + $0x2b0] sm:$0xff] %v877
        %1166 = vst [vmem:[%s198 + $0x2b8] sm:$0xff] %v878
        %1167 = vst [vmem:[%s198 + $0x2c0] sm:$0xff] %v879
        %1168 = vst [vmem:[%s198 + $0x2c8] sm:$0xff] %v880
        %1169 = vst [vmem:[%s198 + $0x2d0] sm:$0xff] %v881
        %1170 = vst [vmem:[%s198 + $0x2d8] sm:$0xff] %v882
        %1171 = vst [vmem:[%s198 + $0x2e0] sm:$0xff] %v883
        %1172 = vst [vmem:[%s198 + $0x2e8] sm:$0xff] %v884
        %1173 = vst [vmem:[%s198 + $0x2f0] sm:$0xff] %v885
        %1174 = vst [vmem:[%s198 + $0x2f8] sm:$0xff] %v886
        %1175 = vst [vmem:[%s198 + $0x300] sm:$0xff] %v887
        %1176 = vst [vmem:[%s198 + $0x308] sm:$0xff] %v888
        %1177 = vst [vmem:[%s198 + $0x310] sm:$0xff] %v889
        %1178 = vst [vmem:[%s198 + $0x318] sm:$0xff] %v890
        %1179 = vst [vmem:[%s198 + $0x320] sm:$0xff] %v891
        %1180 = vst [vmem:[%s198 + $0x328] sm:$0xff] %v892
        %1181 = vst [vmem:[%s198 + $0x330] sm:$0xff] %v893
        %1182 = vst [vmem:[%s198 + $0x338] sm:$0xff] %v894
        %1183 = vst [vmem:[%s198 + $0x340] sm:$0xff] %v895
        %1184 = vst [vmem:[%s198 + $0x348] sm:$0xff] %v896
        %1185 = vst [vmem:[%s198 + $0x350] sm:$0xff] %v897
        %1186 = vst [vmem:[%s198 + $0x358] sm:$0xff] %v898
        %1187 = vst [vmem:[%s198 + $0x360] sm:$0xff] %v899
        %1188 = vst [vmem:[%s198 + $0x368] sm:$0xff] %v900
        %1189 = vst [vmem:[%s198 + $0x370] sm:$0xff] %v901
        %1190 = vst [vmem:[%s198 + $0x378] sm:$0xff] %v902
        %1191 = vst [vmem:[%s198 + $0x380] sm:$0xff] %v903
        %1192 = vst [vmem:[%s198 + $0x388] sm:$0xff] %v904
        %1193 = vst [vmem:[%s198 + $0x390] sm:$0xff] %v905
        %1194 = vst [vmem:[%s198 + $0x398] sm:$0xff] %v906
        %1195 = vst [vmem:[%s198 + $0x3a0] sm:$0xff] %v907
        %1196 = vst [vmem:[%s198 + $0x3a8] sm:$0xff] %v908
        %1197 = vst [vmem:[%s198 + $0x3b0] sm:$0xff] %v909
        %1198 = vst [vmem:[%s198 + $0x3b8] sm:$0xff] %v910
        %1199 = vst [vmem:[%s198 + $0x3c0] sm:$0xff] %v911
        %1200 = vst [vmem:[%s198 + $0x3c8] sm:$0xff] %v912
        %1201 = vst [vmem:[%s198 + $0x3d0] sm:$0xff] %v913
        %1202 = vst [vmem:[%s198 + $0x3d8] sm:$0xff] %v914
        %1203 = vst [vmem:[%s198 + $0x3e0] sm:$0xff] %v915
        %1204 = vst [vmem:[%s198 + $0x3e8] sm:$0xff] %v916
        %1205 = vst [vmem:[%s198 + $0x3f0] sm:$0xff] %v917
        %1206 = vst [vmem:[%s198 + $0x3f8] sm:$0xff] %v918
        %1207 = vst [vmem:[%s198 + $0x400] sm:$0xff] %v919
        %1208 = vst [vmem:[%s198 + $0x408] sm:$0xff] %v920
        %1209 = vst [vmem:[%s198 + $0x410] sm:$0xff] %v921
        %1210 = vst [vmem:[%s198 + $0x418] sm:$0xff] %v922
        %1211 = vst [vmem:[%s198 + $0x420] sm:$0xff] %v923
        %1212 = vst [vmem:[%s198 + $0x428] sm:$0xff] %v924
        %1213 = vst [vmem:[%s198 + $0x430] sm:$0xff] %v925
        %1214 = vst [vmem:[%s198 + $0x438] sm:$0xff] %v926
        %1215 = vst [vmem:[%s198 + $0x440] sm:$0xff] %v927
        %1216 = vst [vmem:[%s198 + $0x448] sm:$0xff] %v928
        %1217 = vst [vmem:[%s198 + $0x450] sm:$0xff] %v929
        %1218 = vst [vmem:[%s198 + $0x458] sm:$0xff] %v930
        %1219 = vst [vmem:[%s198 + $0x460] sm:$0xff] %v931
        %1220 = vst [vmem:[%s198 + $0x468] sm:$0xff] %v932
        %1221 = vst [vmem:[%s198 + $0x470] sm:$0xff] %v933
        %1222 = vst [vmem:[%s198 + $0x478] sm:$0xff] %v934
        %1223 = vst [vmem:[%s198 + $0x480] sm:$0xff] %v935
        %1224 = vst [vmem:[%s198 + $0x488] sm:$0xff] %v936
        %1225 = vst [vmem:[%s198 + $0x490] sm:$0xff] %v937
        %1226 = vst [vmem:[%s198 + $0x498] sm:$0xff] %v938
        %1227 = vst [vmem:[%s198 + $0x4a0] sm:$0xff] %v939
        %1228 = vst [vmem:[%s198 + $0x4a8] sm:$0xff] %v940
        %1229 = vst [vmem:[%s198 + $0x4b0] sm:$0xff] %v941
        %1230 = vst [vmem:[%s198 + $0x4b8] sm:$0xff] %v942
        %1231 = vst [vmem:[%s198 + $0x4c0] sm:$0xff] %v943
        %1232 = vst [vmem:[%s198 + $0x4c8] sm:$0xff] %v944
        %1233 = vst [vmem:[%s198 + $0x4d0] sm:$0xff] %v945
        %1234 = vst [vmem:[%s198 + $0x4d8] sm:$0xff] %v946
        %1235 = vst [vmem:[%s198 + $0x4e0] sm:$0xff] %v947
        %1236 = vst [vmem:[%s198 + $0x4e8] sm:$0xff] %v948
        %1237 = vst [vmem:[%s198 + $0x4f0] sm:$0xff] %v949
        %1238 = vst [vmem:[%s198 + $0x4f8] sm:$0xff] %v950
        %1239 = vst [vmem:[%s198 + $0x500] sm:$0xff] %v951
        %1240 = vst [vmem:[%s198 + $0x508] sm:$0xff] %v952
        %1241 = vst [vmem:[%s198 + $0x510] sm:$0xff] %v953
        %1242 = vst [vmem:[%s198 + $0x518] sm:$0xff] %v954
        %1243 = vst [vmem:[%s198 + $0x520] sm:$0xff] %v955
        %1244 = vst [vmem:[%s198 + $0x528] sm:$0xff] %v956
        %1245 = vst [vmem:[%s198 + $0x530] sm:$0xff] %v957
        %1246 = vst [vmem:[%s198 + $0x538] sm:$0xff] %v958
        %1247 = vst [vmem:[%s198 + $0x540] sm:$0xff] %v959
        %1248 = vst [vmem:[%s198 + $0x548] sm:$0xff] %v960
        %1249 = vst [vmem:[%s198 + $0x550] sm:$0xff] %v961
        %1250 = vst [vmem:[%s198 + $0x558] sm:$0xff] %v962
        %1251 = vst [vmem:[%s198 + $0x560] sm:$0xff] %v963
        %1252 = vst [vmem:[%s198 + $0x568] sm:$0xff] %v964
        %1253 = vst [vmem:[%s198 + $0x570] sm:$0xff] %v965
        %1254 = vst [vmem:[%s198 + $0x578] sm:$0xff] %v966
        %1255 = vst [vmem:[%s198 + $0x580] sm:$0xff] %v967
        %1256 = vst [vmem:[%s198 + $0x588] sm:$0xff] %v968
        %1257 = vst [vmem:[%s198 + $0x590] sm:$0xff] %v969
        %1258 = vst [vmem:[%s198 + $0x598] sm:$0xff] %v970
        %1259 = vst [vmem:[%s198 + $0x5a0] sm:$0xff] %v971
        %1260 = vst [vmem:[%s198 + $0x5a8] sm:$0xff] %v972
        %1261 = vst [vmem:[%s198 + $0x5b0] sm:$0xff] %v973
        %1262 = vst [vmem:[%s198 + $0x5b8] sm:$0xff] %v974
        %1263 = vst [vmem:[%s198 + $0x5c0] sm:$0xff] %v975
        %1264 = vst [vmem:[%s198 + $0x5c8] sm:$0xff] %v976
        %1265 = vst [vmem:[%s198 + $0x5d0] sm:$0xff] %v977
        %1266 = vst [vmem:[%s198 + $0x5d8] sm:$0xff] %v978
        %1267 = vst [vmem:[%s198 + $0x5e0] sm:$0xff] %v979
        %1268 = vst [vmem:[%s198 + $0x5e8] sm:$0xff] %v980
        %1269 = vst [vmem:[%s198 + $0x5f0] sm:$0xff] %v981
        %1270 = vst [vmem:[%s198 + $0x5f8] sm:$0xff] %v982
        %1271 = vst [vmem:[%s198 + $0x600] sm:$0xff] %v983
        %1272 = vst [vmem:[%s198 + $0x608] sm:$0xff] %v984
        %1273 = vst [vmem:[%s198 + $0x610] sm:$0xff] %v985
        %1274 = vst [vmem:[%s198 + $0x618] sm:$0xff] %v986
        %1275 = vst [vmem:[%s198 + $0x620] sm:$0xff] %v987
        %1276 = vst [vmem:[%s198 + $0x628] sm:$0xff] %v988
        %1277 = vst [vmem:[%s198 + $0x630] sm:$0xff] %v989
        %1278 = vst [vmem:[%s198 + $0x638] sm:$0xff] %v990
        %1279 = vst [vmem:[%s198 + $0x640] sm:$0xff] %v991
        %1280 = vst [vmem:[%s198 + $0x648] sm:$0xff] %v992
        %1281 = vst [vmem:[%s198 + $0x650] sm:$0xff] %v993
        %1282 = vst [vmem:[%s198 + $0x658] sm:$0xff] %v994
        %1283 = vst [vmem:[%s198 + $0x660] sm:$0xff] %v995
        %1284 = vst [vmem:[%s198 + $0x668] sm:$0xff] %v996
        %1285 = vst [vmem:[%s198 + $0x670] sm:$0xff] %v997
        %1286 = vst [vmem:[%s198 + $0x678] sm:$0xff] %v998
        %1287 = vst [vmem:[%s198 + $0x680] sm:$0xff] %v999
        %1288 = vst [vmem:[%s198 + $0x688] sm:$0xff] %v1000
        %1289 = vst [vmem:[%s198 + $0x690] sm:$0xff] %v1001
        %1290 = vst [vmem:[%s198 + $0x698] sm:$0xff] %v1002
        %1291 = vst [vmem:[%s198 + $0x6a0] sm:$0xff] %v1003
        %1292 = vst [vmem:[%s198 + $0x6a8] sm:$0xff] %v1004
        %1293 = vst [vmem:[%s198 + $0x6b0] sm:$0xff] %v1005
        %1294 = vst [vmem:[%s198 + $0x6b8] sm:$0xff] %v1006
        %1295 = vst [vmem:[%s198 + $0x6c0] sm:$0xff] %v1007
        %1296 = vst [vmem:[%s198 + $0x6c8] sm:$0xff] %v1008
        %1297 = vst [vmem:[%s198 + $0x6d0] sm:$0xff] %v1009
        %1298 = vst [vmem:[%s198 + $0x6d8] sm:$0xff] %v1010
        %1299 = vst [vmem:[%s198 + $0x6e0] sm:$0xff] %v1011
        %1300 = vst [vmem:[%s198 + $0x6e8] sm:$0xff] %v1012
        %1301 = vst [vmem:[%s198 + $0x6f0] sm:$0xff] %v1013
        %1302 = vst [vmem:[%s198 + $0x6f8] sm:$0xff] %v1014
        %1303 = vst [vmem:[%s198 + $0x700] sm:$0xff] %v1015
        %1304 = vst [vmem:[%s198 + $0x708] sm:$0xff] %v1016
        %1305 = vst [vmem:[%s198 + $0x710] sm:$0xff] %v1017
        %1306 = vst [vmem:[%s198 + $0x718] sm:$0xff] %v1018
        %1307 = vst [vmem:[%s198 + $0x720] sm:$0xff] %v1019
        %1308 = vst [vmem:[%s198 + $0x728] sm:$0xff] %v1020
        %1309 = vst [vmem:[%s198 + $0x730] sm:$0xff] %v1021
        %1310 = vst [vmem:[%s198 + $0x738] sm:$0xff] %v1022
        %1311 = vst [vmem:[%s198 + $0x740] sm:$0xff] %v1023
        %1312 = vst [vmem:[%s198 + $0x748] sm:$0xff] %v1024
        %1313 = vst [vmem:[%s198 + $0x750] sm:$0xff] %v1025
        %1314 = vst [vmem:[%s198 + $0x758] sm:$0xff] %v1026
        %1315 = vst [vmem:[%s198 + $0x760] sm:$0xff] %v1027
        %1316 = vst [vmem:[%s198 + $0x768] sm:$0xff] %v1028
        %1317 = vst [vmem:[%s198 + $0x770] sm:$0xff] %v1029
        %1318 = vst [vmem:[%s198 + $0x778] sm:$0xff] %v1030
        %1319 = vst [vmem:[%s198 + $0x780] sm:$0xff] %v1031
        %1320 = vst [vmem:[%s198 + $0x788] sm:$0xff] %v1032
        %1321 = vst [vmem:[%s198 + $0x790] sm:$0xff] %v1033
        %1322 = vst [vmem:[%s198 + $0x798] sm:$0xff] %v1034
        %1323 = vst [vmem:[%s198 + $0x7a0] sm:$0xff] %v1035
        %1324 = vst [vmem:[%s198 + $0x7a8] sm:$0xff] %v1036
        %1325 = vst [vmem:[%s198 + $0x7b0] sm:$0xff] %v1037
        %1326 = vst [vmem:[%s198 + $0x7b8] sm:$0xff] %v1038
        %1327 = vst [vmem:[%s198 + $0x7c0] sm:$0xff] %v1039
        %1328 = vst [vmem:[%s198 + $0x7c8] sm:$0xff] %v1040
        %1329 = vst [vmem:[%s198 + $0x7d0] sm:$0xff] %v1041
        %1330 = vst [vmem:[%s198 + $0x7d8] sm:$0xff] %v1042
        %1331 = vst [vmem:[%s198 + $0x7e0] sm:$0xff] %v1043
        %1332 = vst [vmem:[%s198 + $0x7e8] sm:$0xff] %v1044
        %1333 = vst [vmem:[%s198 + $0x7f0] sm:$0xff] %v1045
        %1334 = vst [vmem:[%s198 + $0x7f8] sm:$0xff] %v1046
        %1335 = vst [vmem:[%s198 + $0x800] sm:$0xff] %v1047
        %1336 = vst [vmem:[%s198 + $0x808] sm:$0xff] %v1048
        %1337 = vst [vmem:[%s198 + $0x810] sm:$0xff] %v1049
        %1338 = vst [vmem:[%s198 + $0x818] sm:$0xff] %v1050
        %1339 = vst [vmem:[%s198 + $0x820] sm:$0xff] %v1051
        %1340 = vst [vmem:[%s198 + $0x828] sm:$0xff] %v1052
        %1341 = vst [vmem:[%s198 + $0x830] sm:$0xff] %v1053
        %1342 = vst [vmem:[%s198 + $0x838] sm:$0xff] %v1054
        %1343 = vst [vmem:[%s198 + $0x840] sm:$0xff] %v1055
        %1344 = vst [vmem:[%s198 + $0x848] sm:$0xff] %v1056
        %1345 = vst [vmem:[%s198 + $0x850] sm:$0xff] %v1057
        %1346 = vst [vmem:[%s198 + $0x858] sm:$0xff] %v1058
        %1347 = vst [vmem:[%s198 + $0x860] sm:$0xff] %v1059
        %1348 = vst [vmem:[%s198 + $0x868] sm:$0xff] %v1060
        %1349 = vst [vmem:[%s198 + $0x870] sm:$0xff] %v1061
        %1350 = vst [vmem:[%s198 + $0x878] sm:$0xff] %v1062
        %1351 = vst [vmem:[%s198 + $0x880] sm:$0xff] %v1063
        %1352 = vst [vmem:[%s198 + $0x888] sm:$0xff] %v1064
        %1353 = vst [vmem:[%s198 + $0x890] sm:$0xff] %v1065
        %1354 = vst [vmem:[%s198 + $0x898] sm:$0xff] %v1066
        %1355 = vst [vmem:[%s198 + $0x8a0] sm:$0xff] %v1067
        %1356 = vst [vmem:[%s198 + $0x8a8] sm:$0xff] %v1068
        %1357 = vst [vmem:[%s198 + $0x8b0] sm:$0xff] %v1069
        %1358 = vst [vmem:[%s198 + $0x8b8] sm:$0xff] %v1070
        %1359 = vst [vmem:[%s198 + $0x8c0] sm:$0xff] %v1071
        %1360 = vst [vmem:[%s198 + $0x8c8] sm:$0xff] %v1072
        %1361 = vst [vmem:[%s198 + $0x8d0] sm:$0xff] %v1073
        %1362 = vst [vmem:[%s198 + $0x8d8] sm:$0xff] %v1074
        %1363 = vst [vmem:[%s198 + $0x8e0] sm:$0xff] %v1075
        %1364 = vst [vmem:[%s198 + $0x8e8] sm:$0xff] %v1076
        %1365 = vst [vmem:[%s198 + $0x8f0] sm:$0xff] %v1077
        %1366 = vst [vmem:[%s198 + $0x8f8] sm:$0xff] %v1078
        %s1367 = sand.u32 %s98, 1
        %s1368 = scalar_lea.sflag [#allocation6], %s1367
        %s1369 = sand.u32 %s98, 1
        %s1370 = smul.addr %s1369, 2304
        %s1371 = scalar_lea.vmem [#allocation7], %s1370
        // Predicated region
        $region37: #{tpu_custom_call.1} parent=31 // pred_check
          %p1372 = pneg %p108
        $region38: #{tpu_custom_call.1} parent=31 // pred_check_branch
          %1374 = sbr.rel (%p1372) target = $region40
        $region39: #{tpu_custom_call.1} parent=31 // pred_region
          %s1375 = smul.u32 36, %s22
          %s1376 = ssub.s32 129, %s1375
          %p1377 = scmp.lt.s32.totalorder %s1376, 36
          %s1378 = scalar_select %p1377, %s1376, 36
          %s1379 = smul.u32 128, %s1378
          %s1380 = smul.u32 %s1379, 8
          %s1382 = ssub.s32 36864, %s1380
          %1383 = vsyncadd %s1368, %s1382
          %p1384 = scmp.ne.s32.totalorder 0, %s1380
          %s1385 = smul.addr %s1375, 8
          %s1386 = smul.addr %s1385, 128
          %s1387 = scalar_lea.hbm %s3, %s1386
          %s1388 = smul.u32 64, %s1378
          %s1389 = sshll.u32 %s1371, 4
          %s1390 = int_to_ptr.vmem [resolvable:$true] %s1389
          %s1391 = sshll.u32 %s1388, 4
          %1395 = dma.vmem_to_hbm [thread:$0]  (%p1384), %s1390, %s1391, %s1387, %s1368, 1024, 1024, 64
        $region40: #{tpu_custom_call.1} parent=31 // pred_fallthru
          _
      $region32: #{tpu_custom_call.1} parent=5 // pred_fallthru
        _
      %p1396 = scmp.le.s32.totalorder 2, %s17
      // Predicated region
      $region41: #{tpu_custom_call.1} parent=5 // pred_check
        %p1397 = pneg %p1396
      $region42: #{tpu_custom_call.1} parent=5 // pred_check_branch
        %1399 = sbr.rel (%p1397) target = $region44
      $region43: #{tpu_custom_call.1} parent=5 // pred_region
        %s1400 = ssub.s32 %s17, 2
        // Predicated region
        $region45: #{tpu_custom_call.1} parent=43 // pred_check
          %p1401 = pneg %p114
        $region46: #{tpu_custom_call.1} parent=43 // pred_check_branch
          %1403 = sbr.rel (%p1401) target = $region48
        $region47: #{tpu_custom_call.1} parent=43 // pred_region
          %s1404 = sand.u32 %s99, 1
          %s1405 = scalar_lea.sflag [#allocation6], %s1404
          %s1406 = sand.u32 %s99, 1
          %s1407 = smul.addr %s1406, 2304
          %s1408 = scalar_lea.vmem [#allocation7], %s1407
          %1409 = dma.done %s1405, 36864
        $region48: #{tpu_custom_call.1} parent=43 // pred_fallthru
          _
      $region44: #{tpu_custom_call.1} parent=5 // pred_fallthru
        _
    $region6: #{tpu_custom_call.1} parent=1 // loop_footer
      %s21 = sadd.s32 1, %s17
    $region7: #{tpu_custom_call.1} parent=1 // loop_footer_branch
      %16 = sbr.rel target = $region3
    $region8: #{tpu_custom_call.1} parent=1 // loop_exit
      _
    %1410 = vsyncpa [#allocation5], 1
    %s1411 = scalar_lea.sflag [#allocation5], 1
    %1412 = vsyncpa %s1411, 1
    %1413 = vsyncpa [#allocation6], 1
    %s1414 = scalar_lea.sflag [#allocation6], 1
    %1415 = vsyncpa %s1414, 1

</llo_original>
